<compile_context>
chip_gen: v7x
topology: tpu7x:2x2x1
jax: 0.10.0
libtpu: 0.0.40
codegen_flags: <defaults>
</compile_context>

<pallas_src>
import jax
import jax.numpy as jnp
from jax.experimental import pallas as pl
from jax.experimental.pallas import tpu as pltpu

BN_EPS = 1e-5
HIDDEN = 512            # fixed by the module: Linear(cfg[-2], 512)
LANE = 128


def vgg_classifier_kernel(x_ref, w1_ref, gamma_ref, beta_ref, w2_ref, b2_ref,
                          out_ref, h_acc):
    """Fused Linear -> BatchNorm1d(train-mode batch stats) -> Linear.

    Grid axis 0 tiles the contraction (D) dimension of the first matmul.
    x_ref:  [B, TK]        bf16 tile of the flattened input
    w1_ref: [TK, 512]      bf16 tile of Linear-1 weight (already [in, out])
    w2_ref: [512, N_PAD]   bf16 Linear-2 weight (lane-padded)
    out_ref:[B, N_PAD]     f32 logits (padded; sliced outside)
    h_acc:  [B, 512]       f32 accumulator scratch for Linear-1
    """
    k = pl.program_id(0)

    @pl.when(k == 0)
    def _init():
        h_acc[...] = jnp.zeros_like(h_acc)

    # Partial Linear 1: bf16 operands, f32 accumulation on the MXU.
    # (Linear-1 bias intentionally omitted: cancelled by BN mean subtraction.)
    h_acc[...] += jnp.dot(x_ref[...], w1_ref[...],
                          preferred_element_type=jnp.float32)

    @pl.when(k == pl.num_programs(0) - 1)
    def _finalize():
        h = h_acc[...]                                       # [B, 512] f32
        inv_b = 1.0 / h.shape[0]
        # BatchNorm1d, training mode: batch mean, biased batch variance.
        mean = jnp.sum(h, axis=0, keepdims=True) * inv_b     # [1, 512]
        mean_sq = jnp.sum(h * h, axis=0, keepdims=True) * inv_b
        var = mean_sq - mean * mean                          # one-pass variance
        h_hat = (h - mean) * jax.lax.rsqrt(var + BN_EPS)
        h_bn = h_hat * gamma_ref[...] + beta_ref[...]        # f32

        # Linear 2: bf16 operands, f32 accumulation, lane-dense padded output.
        out = jnp.dot(h_bn.astype(jnp.bfloat16), w2_ref[...],
                      preferred_element_type=jnp.float32) + b2_ref[...]
        out_ref[...] = out.astype(out_ref.dtype)


def prepare_params(params, num_class, tk=512):
    """One-time weight preparation: transpose to [in, out], pad, cast to bf16.

    Done once (not per forward call) so no per-call HBM transpose pass.
    """
    hidden, d = params["w1"].shape
    assert hidden == HIDDEN
    assert tk % LANE == 0
    d_pad = pl.cdiv(d, tk) * tk
    n_pad = pl.cdiv(num_class, LANE) * LANE

    w1t = jnp.zeros((d_pad, HIDDEN), jnp.bfloat16)
    w1t = w1t.at[:d, :].set(params["w1"].T.astype(jnp.bfloat16))
    w2t = jnp.zeros((HIDDEN, n_pad), jnp.bfloat16)
    w2t = w2t.at[:, :num_class].set(params["w2"].T.astype(jnp.bfloat16))
    b2 = jnp.zeros((1, n_pad), jnp.float32)
    b2 = b2.at[:, :num_class].set(params["b2"].astype(jnp.float32))

    return {
        "w1t": w1t,
        "w2t": w2t,
        "b2": b2,
        "gamma": params["gamma"].reshape(1, -1).astype(jnp.float32),
        "beta": params["beta"].reshape(1, -1).astype(jnp.float32),
        "d": d,
        "d_pad": d_pad,
        "n_pad": n_pad,
        "num_class": num_class,
        "tk": tk,
    }


def vgg_block_classifier(x, prep):
    """x: [B, C, H, W] float32 (C*H*W == cfg[-2]).  Returns logits [B, num_class]."""
    B = x.shape[0]
    d, d_pad, tk = prep["d"], prep["d_pad"], prep["tk"]
    n_pad, num_class = prep["n_pad"], prep["num_class"]

    x2d = x.reshape(B, -1).astype(jnp.bfloat16)              # flatten(x, 1)
    if d_pad > d:
        x2d = jnp.pad(x2d, ((0, 0), (0, d_pad - d)))         # zero-pad D axis

    kt = d_pad // tk

    out_padded = pl.pallas_call(
        vgg_classifier_kernel,
        out_shape=jax.ShapeDtypeStruct((B, n_pad), jnp.float32),
        grid_spec=pltpu.PrefetchScalarGridSpec(
            num_scalar_prefetch=0,
            grid=(kt,),
            in_specs=[
                pl.BlockSpec((B, tk), lambda k: (0, k)),          # x tile
                pl.BlockSpec((tk, HIDDEN), lambda k: (k, 0)),     # w1 tile
                pl.BlockSpec((1, HIDDEN), lambda k: (0, 0)),      # gamma
                pl.BlockSpec((1, HIDDEN), lambda k: (0, 0)),      # beta
                pl.BlockSpec((HIDDEN, n_pad), lambda k: (0, 0)),  # w2 (padded)
                pl.BlockSpec((1, n_pad), lambda k: (0, 0)),       # b2 (padded)
            ],
            out_specs=pl.BlockSpec((B, n_pad), lambda k: (0, 0)),
            scratch_shapes=[pltpu.VMEM((B, HIDDEN), jnp.float32)],
        ),
        compiler_params=pltpu.CompilerParams(
            dimension_semantics=("arbitrary",),       # K reduction axis
            vmem_limit_bytes=32 * 1024 * 1024,        # >= v5e's 16 MiB default
        ),
    )(x2d, prep["w1t"], prep["gamma"], prep["beta"], prep["w2t"], prep["b2"])

    return out_padded[:, :num_class]


def init_params(key, in_features, num_class):
    """Matches VGG_Block._initialize_weights: Linear ~ N(0, 0.01), bias 0;
    BatchNorm weight 1, bias 0."""
    k1, k2 = jax.random.split(key)
    return {
        "w1": 0.01 * jax.random.normal(k1, (HIDDEN, in_features), jnp.float32),
        "b1": jnp.zeros((HIDDEN,), jnp.float32),   # kept for fidelity; cancelled by BN
        "gamma": jnp.ones((HIDDEN,), jnp.float32),
        "beta": jnp.zeros((HIDDEN,), jnp.float32),
        "w2": 0.01 * jax.random.normal(k2, (num_class, HIDDEN), jnp.float32),
        "b2": jnp.zeros((num_class,), jnp.float32),
    }


def reference(x, params):
    """Pure-JAX f32 reference of the PyTorch forward (classifier branch)."""
    B = x.shape[0]
    h = x.reshape(B, -1) @ params["w1"].T + params["b1"]
    mean = jnp.mean(h, axis=0, keepdims=True)
    var = jnp.mean((h - mean) ** 2, axis=0, keepdims=True)
    h = (h - mean) / jnp.sqrt(var + BN_EPS) * params["gamma"] + params["beta"]
    return h @ params["w2"].T + params["b2"]


if __name__ == "__main__":
    # Small shapes: batch=8, channels=4, spatial=16 -> D = 4*16*16 = 1024 = cfg[-2].
    # With tk=512 the grid has 2 K-steps, exercising the accumulator path.
    B, C, H, W = 8, 4, 16, 16
    num_class = 10

    key = jax.random.PRNGKey(0)
    kx, kp = jax.random.split(key)
    x = jax.random.normal(kx, (B, C, H, W), jnp.float32)
    params = init_params(kp, C * H * W, num_class)
    prep = prepare_params(params, num_class, tk=512)         # one-time prep

    out = vgg_block_classifier(x, prep)
    out = jax.block_until_ready(out)

    ref = reference(x, params)
    assert out.shape == (B, num_class)
    # bf16 MXU operands (f32 accumulation) vs. an f32 reference: expect ~1e-3
    # absolute error on logits of scale ~0.2, so a 2e-2 tolerance is ample.
    assert jnp.allclose(out, ref, atol=2e-2, rtol=2e-2), "mismatch vs reference"

    print("KERNEL_OK")
</pallas_src>

<mosaic_0001>
module attributes {stable_mosaic.version = 11 : i64} {
  func.func @vgg_classifier_kernel(%arg0: i32, %arg1: memref<8x512xbf16, #tpu.memory_space<vmem>>, %arg2: memref<512x512xbf16, #tpu.memory_space<vmem>>, %arg3: memref<1x512xf32, #tpu.memory_space<vmem>>, %arg4: memref<1x512xf32, #tpu.memory_space<vmem>>, %arg5: memref<512x128xbf16, #tpu.memory_space<vmem>>, %arg6: memref<1x128xf32, #tpu.memory_space<vmem>>, %arg7: memref<8x128xf32, #tpu.memory_space<vmem>>, %arg8: memref<8x512xf32, #tpu.memory_space<vmem>>) attributes {dimension_semantics = [#tpu.dimension_semantics<arbitrary>], iteration_bounds = array<i64: 2>, scalar_prefetch = 0 : i64, scratch_operands = 1 : i64, tpu.core_type = #tpu.core_type<tc>, window_params = [{transform_indices = @transform_0, window_bounds = array<i64: 8, 512>}, {transform_indices = @transform_1, window_bounds = array<i64: 512, 512>}, {pipeline_mode = #tpu.pipeline_mode<synchronous>, transform_indices = @transform_2, window_bounds = array<i64: 1, 512>}, {pipeline_mode = #tpu.pipeline_mode<synchronous>, transform_indices = @transform_3, window_bounds = array<i64: 1, 512>}, {pipeline_mode = #tpu.pipeline_mode<synchronous>, transform_indices = @transform_4, window_bounds = array<i64: 512, 128>}, {pipeline_mode = #tpu.pipeline_mode<synchronous>, transform_indices = @transform_5, window_bounds = array<i64: 1, 128>}, {pipeline_mode = #tpu.pipeline_mode<synchronous>, transform_indices = @transform_6, window_bounds = array<i64: 8, 128>}]} {
    %c0_i32 = arith.constant 0 : i32
    %0 = arith.cmpi eq, %arg0, %c0_i32 : i32
    %1 = arith.extui %0 : i1 to i32
    %c0_i32_0 = arith.constant 0 : i32
    %2 = arith.cmpi ne, %1, %c0_i32_0 : i32
    scf.if %2 {
      %cst_9 = arith.constant 0.000000e+00 : f32
      %12 = vector.broadcast %cst_9 : f32 to vector<8x512xf32>
      %c0_10 = arith.constant 0 : index
      %c0_11 = arith.constant 0 : index
      %13 = vector.load %arg8[%c0_10, %c0_11] : memref<8x512xf32, #tpu.memory_space<vmem>>, vector<8x512xf32>
      tpu.vector_store %arg8[%c0_10, %c0_11], %12 {strides = array<i32>} : memref<8x512xf32, #tpu.memory_space<vmem>>, vector<8x512xf32>,
    } else {
    }
    %c0 = arith.constant 0 : index
    %c0_1 = arith.constant 0 : index
    %3 = vector.load %arg8[%c0, %c0_1] : memref<8x512xf32, #tpu.memory_space<vmem>>, vector<8x512xf32>
    %c0_2 = arith.constant 0 : index
    %c0_3 = arith.constant 0 : index
    %4 = vector.load %arg1[%c0_2, %c0_3] : memref<8x512xbf16, #tpu.memory_space<vmem>>, vector<8x512xbf16>
    %c0_4 = arith.constant 0 : index
    %c0_5 = arith.constant 0 : index
    %5 = vector.load %arg2[%c0_4, %c0_5] : memref<512x512xbf16, #tpu.memory_space<vmem>>, vector<512x512xbf16>
    %cst = arith.constant dense<0.000000e+00> : vector<8x512xf32>
    %6 = tpu.matmul %4, %5, %cst {dimension_numbers = #tpu.dot_dimension_numbers<[1], [0], [0], [1], [0, 0, 1, 1], [], []>} : vector<8x512xbf16>, vector<512x512xbf16>, vector<8x512xf32> -> vector<8x512xf32>
    %7 = arith.addf %3, %6 : vector<8x512xf32>
    %c0_6 = arith.constant 0 : index
    %c0_7 = arith.constant 0 : index
    %8 = vector.load %arg8[%c0_6, %c0_7] : memref<8x512xf32, #tpu.memory_space<vmem>>, vector<8x512xf32>
    tpu.vector_store %arg8[%c0_6, %c0_7], %7 {strides = array<i32>} : memref<8x512xf32, #tpu.memory_space<vmem>>, vector<8x512xf32>,
    %c1_i32 = arith.constant 1 : i32
    %9 = arith.cmpi eq, %arg0, %c1_i32 : i32
    %10 = arith.extui %9 : i1 to i32
    %c0_i32_8 = arith.constant 0 : i32
    %11 = arith.cmpi ne, %10, %c0_i32_8 : i32
    scf.if %11 {
      %c0_9 = arith.constant 0 : index
      %c0_10 = arith.constant 0 : index
      %12 = vector.load %arg8[%c0_9, %c0_10] : memref<8x512xf32, #tpu.memory_space<vmem>>, vector<8x512xf32>
      %cst_11 = arith.constant dense<0.000000e+00> : vector<512xf32>
      %13 = vector.multi_reduction <add>, %12, %cst_11 [0] : vector<8x512xf32> to vector<512xf32>
      %14 = vector.shape_cast %13 : vector<512xf32> to vector<1x512xf32>
      %cst_12 = arith.constant 1.250000e-01 : f32
      %15 = vector.broadcast %cst_12 : f32 to vector<1x512xf32>
      %16 = arith.mulf %14, %15 : vector<1x512xf32>
      %17 = arith.mulf %12, %12 : vector<8x512xf32>
      %cst_13 = arith.constant dense<0.000000e+00> : vector<512xf32>
      %18 = vector.multi_reduction <add>, %17, %cst_13 [0] : vector<8x512xf32> to vector<512xf32>
      %19 = vector.shape_cast %18 : vector<512xf32> to vector<1x512xf32>
      %cst_14 = arith.constant 1.250000e-01 : f32
      %20 = vector.broadcast %cst_14 : f32 to vector<1x512xf32>
      %21 = arith.mulf %19, %20 : vector<1x512xf32>
      %22 = arith.mulf %16, %16 : vector<1x512xf32>
      %23 = arith.subf %21, %22 : vector<1x512xf32>
      %24 = vector.broadcast %16 : vector<1x512xf32> to vector<8x512xf32>
      %25 = arith.subf %12, %24 : vector<8x512xf32>
      %cst_15 = arith.constant 9.99999974E-6 : f32
      %26 = vector.broadcast %cst_15 : f32 to vector<1x512xf32>
      %27 = arith.addf %23, %26 : vector<1x512xf32>
      %28 = math.rsqrt %27 : vector<1x512xf32>
      %29 = vector.broadcast %28 : vector<1x512xf32> to vector<8x512xf32>
      %30 = arith.mulf %25, %29 : vector<8x512xf32>
      %c0_16 = arith.constant 0 : index
      %c0_17 = arith.constant 0 : index
      %31 = vector.load %arg3[%c0_16, %c0_17] : memref<1x512xf32, #tpu.memory_space<vmem>>, vector<1x512xf32>
      %32 = vector.broadcast %31 : vector<1x512xf32> to vector<8x512xf32>
      %33 = arith.mulf %30, %32 : vector<8x512xf32>
      %c0_18 = arith.constant 0 : index
      %c0_19 = arith.constant 0 : index
      %34 = vector.load %arg4[%c0_18, %c0_19] : memref<1x512xf32, #tpu.memory_space<vmem>>, vector<1x512xf32>
      %35 = vector.broadcast %34 : vector<1x512xf32> to vector<8x512xf32>
      %36 = arith.addf %33, %35 : vector<8x512xf32>
      %37 = arith.truncf %36 : vector<8x512xf32> to vector<8x512xbf16>
      %c0_20 = arith.constant 0 : index
      %c0_21 = arith.constant 0 : index
      %38 = vector.load %arg5[%c0_20, %c0_21] : memref<512x128xbf16, #tpu.memory_space<vmem>>, vector<512x128xbf16>
      %cst_22 = arith.constant dense<0.000000e+00> : vector<8x128xf32>
      %39 = tpu.matmul %37, %38, %cst_22 {dimension_numbers = #tpu.dot_dimension_numbers<[1], [0], [0], [1], [0, 0, 1, 1], [], []>} : vector<8x512xbf16>, vector<512x128xbf16>, vector<8x128xf32> -> vector<8x128xf32>
      %c0_23 = arith.constant 0 : index
      %c0_24 = arith.constant 0 : index
      %40 = vector.load %arg6[%c0_23, %c0_24] : memref<1x128xf32, #tpu.memory_space<vmem>>, vector<1x128xf32>
      %41 = vector.broadcast %40 : vector<1x128xf32> to vector<8x128xf32>
      %42 = arith.addf %39, %41 : vector<8x128xf32>
      %c0_25 = arith.constant 0 : index
      %c0_26 = arith.constant 0 : index
      %43 = vector.load %arg7[%c0_25, %c0_26] : memref<8x128xf32, #tpu.memory_space<vmem>>, vector<8x128xf32>
      tpu.vector_store %arg7[%c0_25, %c0_26], %42 {strides = array<i32>} : memref<8x128xf32, #tpu.memory_space<vmem>>, vector<8x128xf32>,
    } else {
    }
    return
  }
  func.func @transform_0(%arg0: i32) -> (i32, i32) {
    %c0_i32 = arith.constant 0 : i32
    %c0_i32_0 = arith.constant 0 : i32
    return %c0_i32, %arg0 : i32, i32
  }
  func.func @transform_1(%arg0: i32) -> (i32, i32) {
    %c0_i32 = arith.constant 0 : i32
    %c0_i32_0 = arith.constant 0 : i32
    return %arg0, %c0_i32 : i32, i32
  }
  func.func @transform_2(%arg0: i32) -> (i32, i32) {
    %c0_i32 = arith.constant 0 : i32
    %c0_i32_0 = arith.constant 0 : i32
    %c0_i32_1 = arith.constant 0 : i32
    return %c0_i32, %c0_i32_0 : i32, i32
  }
  func.func @transform_3(%arg0: i32) -> (i32, i32) {
    %c0_i32 = arith.constant 0 : i32
    %c0_i32_0 = arith.constant 0 : i32
    %c0_i32_1 = arith.constant 0 : i32
    return %c0_i32, %c0_i32_0 : i32, i32
  }
  func.func @transform_4(%arg0: i32) -> (i32, i32) {
    %c0_i32 = arith.constant 0 : i32
    %c0_i32_0 = arith.constant 0 : i32
    %c0_i32_1 = arith.constant 0 : i32
    return %c0_i32, %c0_i32_0 : i32, i32
  }
  func.func @transform_5(%arg0: i32) -> (i32, i32) {
    %c0_i32 = arith.constant 0 : i32
    %c0_i32_0 = arith.constant 0 : i32
    %c0_i32_1 = arith.constant 0 : i32
    return %c0_i32, %c0_i32_0 : i32, i32
  }
  func.func @transform_6(%arg0: i32) -> (i32, i32) {
    %c0_i32 = arith.constant 0 : i32
    %c0_i32_0 = arith.constant 0 : i32
    %c0_i32_1 = arith.constant 0 : i32
    return %c0_i32, %c0_i32_0 : i32, i32
  }
}

</mosaic_0001>

<llo_original>
// kernel: tpu_custom_call.1
$region0: #{tpu_custom_call.1}
  #allocation0 [shape = 'u32[]', space=smem, size = 0x4, offset = 0x4, fixed_abs, tag = 'smem constant byte address 0x4 - core index']
  #allocation1 [shape = 'u32[144,128]{1,0:T(1,128)}', space=vmem, size = 0x12000, scoped, tag = 'internal scratch']
  #allocation2 [shape = 'f32[8,512]{1,0:T(8,128)}', space=vmem, size = 0x4000, scoped, tag = 'scratch operand']
  %s0 = inlined_call_operand.hbm [shape: bf16[8,1024], index: 0, kind: input, shape index: {}]
  %s1 = inlined_call_operand.hbm [shape: bf16[1024,512], index: 1, kind: input, shape index: {}]
  %s2 = inlined_call_operand.vmem [shape: f32[1,512], index: 2, kind: input, shape index: {}]
  %s3 = inlined_call_operand.vmem [shape: f32[1,512], index: 3, kind: input, shape index: {}]
  %s4 = inlined_call_operand.hbm [shape: bf16[512,128], index: 4, kind: input, shape index: {}]
  %s5 = inlined_call_operand.vmem [shape: f32[1,128], index: 5, kind: input, shape index: {}]
  %s6 = inlined_call_operand.hbm [shape: f32[8,128], index: 6, kind: output, shape index: {}]
  %s7 = sld [smem:[#allocation0]]
  $region77: #{tpu_custom_call.1} parent=0
    _
  %s9 = ssub.s32 1, %s7
  %s10 = scalar_select 0, %s9, %s7
  $region1: #{tpu_custom_call.1} parent=0
    #allocation3 [shape = 'u8[16384]{0}', space=vmem, size = 0x4000, scoped, tag = 'input window, operand 0']
    #allocation4 [shape = 's32[2]{0}', space=sflag, size = 0x8, scoped, tag = 'scoped memory for tpu_custom_call.1']
    #allocation5 [shape = 's32[2]{0}', space=sflag, size = 0x8, scoped, tag = 'scoped memory for tpu_custom_call.1']
    #allocation6 [shape = 'u8[1048576]{0}', space=vmem, size = 0x100000, scoped, tag = 'input window, operand 1']
    #allocation7 [shape = 's32[2]{0}', space=sflag, size = 0x8, scoped, tag = 'scoped memory for tpu_custom_call.1']
    #allocation8 [shape = 'u8[131072]{0}', space=vmem, size = 0x20000, scoped, tag = 'input window, operand 4, single buffered']
    #allocation9 [shape = 'u8[4096]{0}', space=vmem, size = 0x1000, scoped, tag = 'output window, operand 0, single buffered']
    %11 = vsyncpa [#allocation4], 0
    %s12 = scalar_lea.sflag [#allocation4], 1
    %13 = vsyncpa %s12, 0
    %14 = vsyncpa [#allocation7], 0
    %s15 = scalar_lea.sflag [#allocation7], 1
    %16 = vsyncpa %s15, 0
    %17 = vsyncpa [#allocation5], 0
    loop: start=0, step=1, limit=4
    $region2: #{tpu_custom_call.1} parent=1 // loop_pre_header
      _
    $region3: #{tpu_custom_call.1} parent=1 // loop_header
      %s19 = sphi 0, %s23
      %p20 = scmp.ge.s32.totalorder %s19, 4
      %s29 = sphi 0, %s31
      %s32 = sphi 0, %s29
      %s33 = sphi 0, %s32
      %s49 = sphi 0, %s33
      %s55 = sphi 0, %s57
      %s58 = sphi 0, %s55
      %s59 = sphi 0, %s58
      %s75 = sphi 0, %s59
      %s79 = sphi 0, %s79
      %s81 = sphi 0, %s79
      %s82 = sphi 0, %s81
      %s96 = sphi 0, %s82
      %s100 = sphi 0, %s100
      %s102 = sphi 0, %s100
      %s103 = sphi 0, %s102
      %s117 = sphi 0, %s103
      %s121 = sphi 0, %s121
      %s123 = sphi 0, %s121
      %s124 = sphi 0, %s123
      %s138 = sphi 0, %s124
      %s142 = sphi 0, %s142
      %s144 = sphi 0, %s142
      %s145 = sphi 0, %s144
      %s159 = sphi 0, %s145
      %s163 = sphi 0, %s163
      %s165 = sphi 0, %s163
      %s166 = sphi 0, %s165
      %s180 = sphi 0, %s166
    $region4: #{tpu_custom_call.1} parent=1 // loop_header_branch
      %22 = sbr.rel (%p20) target = $region8
    $region5: #{tpu_custom_call.1} parent=1 // loop_body
      %s24 = ssub.s32 %s19, 1
      %s25 = ssub.s32 %s19, 2
      %s26 = sadd.s32 %s19, 1
      %s27 = ssub.s32 %s19, %s26
      %p28 = scmp.eq.s32.totalorder %s27, 0
      %s30 = sadd.s32 %s29, 1
      %s31 = scalar_select %p28, %s29, %s30
      %p34 = pneg %p28
      %p35 = scmp.eq.s32.totalorder %s19, 1
      %p36 = por %p34, %p35
      %p37 = scmp.ne.s32.totalorder %s29, %s32
      %p38 = scmp.eq.s32.totalorder %s19, 0
      %p39 = por %p37, %p38
      %p40 = scmp.ne.s32.totalorder %s29, %s32
      %p41 = scmp.eq.s32.totalorder %s24, 1
      %p42 = por %p40, %p41
      %p43 = scmp.ne.s32.totalorder %s32, %s33
      %p44 = scmp.eq.s32.totalorder %s24, 0
      %p45 = por %p43, %p44
      %p46 = scmp.ne.s32.totalorder %s32, %s33
      %p47 = scmp.eq.s32.totalorder %s25, 1
      %p48 = por %p46, %p47
      %p50 = scmp.ne.s32.totalorder %s33, %s49
      %p51 = scmp.eq.s32.totalorder %s25, 0
      %p52 = por %p50, %p51
      %s53 = ssub.s32 %s19, %s26
      %p54 = scmp.eq.s32.totalorder %s53, 0
      %s56 = sadd.s32 %s55, 1
      %s57 = scalar_select %p54, %s55, %s56
      %p60 = pneg %p54
      %p61 = scmp.eq.s32.totalorder %s19, 1
      %p62 = por %p60, %p61
      %p63 = scmp.ne.s32.totalorder %s55, %s58
      %p64 = scmp.eq.s32.totalorder %s19, 0
      %p65 = por %p63, %p64
      %p66 = scmp.ne.s32.totalorder %s55, %s58
      %p67 = scmp.eq.s32.totalorder %s24, 1
      %p68 = por %p66, %p67
      %p69 = scmp.ne.s32.totalorder %s58, %s59
      %p70 = scmp.eq.s32.totalorder %s24, 0
      %p71 = por %p69, %p70
      %p72 = scmp.ne.s32.totalorder %s58, %s59
      %p73 = scmp.eq.s32.totalorder %s25, 1
      %p74 = por %p72, %p73
      %p76 = scmp.ne.s32.totalorder %s59, %s75
      %p77 = scmp.eq.s32.totalorder %s25, 0
      %p78 = por %p76, %p77
      %s80 = sadd.s32 %s79, 1
      %p83 = scmp.eq.s32.totalorder %s19, 1
      %p84 = scmp.ne.s32.totalorder %s79, %s81
      %p85 = scmp.eq.s32.totalorder %s19, 0
      %p86 = por %p84, %p85
      %p87 = scmp.ne.s32.totalorder %s79, %s81
      %p88 = scmp.eq.s32.totalorder %s24, 1
      %p89 = por %p87, %p88
      %p90 = scmp.ne.s32.totalorder %s81, %s82
      %p91 = scmp.eq.s32.totalorder %s24, 0
      %p92 = por %p90, %p91
      %p93 = scmp.ne.s32.totalorder %s81, %s82
      %p94 = scmp.eq.s32.totalorder %s25, 1
      %p95 = por %p93, %p94
      %p97 = scmp.ne.s32.totalorder %s82, %s96
      %p98 = scmp.eq.s32.totalorder %s25, 0
      %p99 = por %p97, %p98
      %s101 = sadd.s32 %s100, 1
      %p104 = scmp.eq.s32.totalorder %s19, 1
      %p105 = scmp.ne.s32.totalorder %s100, %s102
      %p106 = scmp.eq.s32.totalorder %s19, 0
      %p107 = por %p105, %p106
      %p108 = scmp.ne.s32.totalorder %s100, %s102
      %p109 = scmp.eq.s32.totalorder %s24, 1
      %p110 = por %p108, %p109
      %p111 = scmp.ne.s32.totalorder %s102, %s103
      %p112 = scmp.eq.s32.totalorder %s24, 0
      %p113 = por %p111, %p112
      %p114 = scmp.ne.s32.totalorder %s102, %s103
      %p115 = scmp.eq.s32.totalorder %s25, 1
      %p116 = por %p114, %p115
      %p118 = scmp.ne.s32.totalorder %s103, %s117
      %p119 = scmp.eq.s32.totalorder %s25, 0
      %p120 = por %p118, %p119
      %s122 = sadd.s32 %s121, 1
      %p125 = scmp.eq.s32.totalorder %s19, 1
      %p126 = scmp.ne.s32.totalorder %s121, %s123
      %p127 = scmp.eq.s32.totalorder %s19, 0
      %p128 = por %p126, %p127
      %p129 = scmp.ne.s32.totalorder %s121, %s123
      %p130 = scmp.eq.s32.totalorder %s24, 1
      %p131 = por %p129, %p130
      %p132 = scmp.ne.s32.totalorder %s123, %s124
      %p133 = scmp.eq.s32.totalorder %s24, 0
      %p134 = por %p132, %p133
      %p135 = scmp.ne.s32.totalorder %s123, %s124
      %p136 = scmp.eq.s32.totalorder %s25, 1
      %p137 = por %p135, %p136
      %p139 = scmp.ne.s32.totalorder %s124, %s138
      %p140 = scmp.eq.s32.totalorder %s25, 0
      %p141 = por %p139, %p140
      %s143 = sadd.s32 %s142, 1
      %p146 = scmp.eq.s32.totalorder %s19, 1
      %p147 = scmp.ne.s32.totalorder %s142, %s144
      %p148 = scmp.eq.s32.totalorder %s19, 0
      %p149 = por %p147, %p148
      %p150 = scmp.ne.s32.totalorder %s142, %s144
      %p151 = scmp.eq.s32.totalorder %s24, 1
      %p152 = por %p150, %p151
      %p153 = scmp.ne.s32.totalorder %s144, %s145
      %p154 = scmp.eq.s32.totalorder %s24, 0
      %p155 = por %p153, %p154
      %p156 = scmp.ne.s32.totalorder %s144, %s145
      %p157 = scmp.eq.s32.totalorder %s25, 1
      %p158 = por %p156, %p157
      %p160 = scmp.ne.s32.totalorder %s145, %s159
      %p161 = scmp.eq.s32.totalorder %s25, 0
      %p162 = por %p160, %p161
      %s164 = sadd.s32 %s163, 1
      %p167 = scmp.eq.s32.totalorder %s19, 1
      %p168 = scmp.ne.s32.totalorder %s163, %s165
      %p169 = scmp.eq.s32.totalorder %s19, 0
      %p170 = por %p168, %p169
      %p171 = scmp.ne.s32.totalorder %s163, %s165
      %p172 = scmp.eq.s32.totalorder %s24, 1
      %p173 = por %p171, %p172
      %p174 = scmp.ne.s32.totalorder %s165, %s166
      %p175 = scmp.eq.s32.totalorder %s24, 0
      %p176 = por %p174, %p175
      %p177 = scmp.ne.s32.totalorder %s165, %s166
      %p178 = scmp.eq.s32.totalorder %s25, 1
      %p179 = por %p177, %p178
      %p181 = scmp.ne.s32.totalorder %s166, %s180
      %p182 = scmp.eq.s32.totalorder %s25, 0
      %p183 = por %p181, %p182
      %p184 = scmp.le.s32.totalorder 1, %s19
      %p185 = scmp.lt.s32.totalorder %s19, 3
      %p186 = pnand %p184, %p185
      %p187 = pneg %p186
      // Predicated region
      $region9: #{tpu_custom_call.1} parent=5 // pred_check
        _
      $region10: #{tpu_custom_call.1} parent=5 // pred_check_branch
        %189 = sbr.rel (%p186) target = $region12
      $region11: #{tpu_custom_call.1} parent=5 // pred_region
        %s190 = ssub.s32 %s19, 1
        // Predicated region
        $region13: #{tpu_custom_call.1} parent=11 // pred_check
          %p191 = pneg %p92
        $region14: #{tpu_custom_call.1} parent=11 // pred_check_branch
          %193 = sbr.rel (%p191) target = $region16
        $region15: #{tpu_custom_call.1} parent=11 // pred_region
          _
        $region16: #{tpu_custom_call.1} parent=11 // pred_fallthru
          _
        // Predicated region
        $region17: #{tpu_custom_call.1} parent=11 // pred_check
          %p194 = pneg %p113
        $region18: #{tpu_custom_call.1} parent=11 // pred_check_branch
          %196 = sbr.rel (%p194) target = $region20
        $region19: #{tpu_custom_call.1} parent=11 // pred_region
          _
        $region20: #{tpu_custom_call.1} parent=11 // pred_fallthru
          _
        // Predicated region
        $region21: #{tpu_custom_call.1} parent=11 // pred_check
          %p197 = pneg %p134
        $region22: #{tpu_custom_call.1} parent=11 // pred_check_branch
          %199 = sbr.rel (%p197) target = $region24
        $region23: #{tpu_custom_call.1} parent=11 // pred_region
          %s201 = ssub.s32 4096, 4096
          %202 = vsyncadd [#allocation7], %s201
          %s203 = sshll.u32 [#allocation8], 4
          %s204 = int_to_ptr.vmem [resolvable:$true] %s203
          %209 = dma.hbm_to_vmem [thread:$0]  %s4, 4096, %s204, [#allocation7], 64, 64, 4
        $region24: #{tpu_custom_call.1} parent=11 // pred_fallthru
          _
        // Predicated region
        $region25: #{tpu_custom_call.1} parent=11 // pred_check
          %p210 = pneg %p155
        $region26: #{tpu_custom_call.1} parent=11 // pred_check_branch
          %212 = sbr.rel (%p210) target = $region28
        $region27: #{tpu_custom_call.1} parent=11 // pred_region
          _
        $region28: #{tpu_custom_call.1} parent=11 // pred_fallthru
          _
      $region12: #{tpu_custom_call.1} parent=5 // pred_fallthru
        _
      %p213 = scmp.lt.s32.totalorder %s19, 2
      // Predicated region
      $region29: #{tpu_custom_call.1} parent=5 // pred_check
        %p214 = pneg %p213
      $region30: #{tpu_custom_call.1} parent=5 // pred_check_branch
        %216 = sbr.rel (%p214) target = $region32
      $region31: #{tpu_custom_call.1} parent=5 // pred_region
        // Predicated region
        $region33: #{tpu_custom_call.1} parent=31 // pred_check
          %p217 = pneg %p39
        $region34: #{tpu_custom_call.1} parent=31 // pred_check_branch
          %219 = sbr.rel (%p217) target = $region36
        $region35: #{tpu_custom_call.1} parent=31 // pred_region
          %s220 = sand.u32 %s29, 1
          %s221 = scalar_lea.sflag [#allocation4], %s220
          %s222 = sand.u32 %s29, 1
          %s223 = smul.addr %s222, 16
          %s224 = scalar_lea.vmem [#allocation3], %s223
          %s225 = smul.u32 4, %s19
          %s227 = ssub.s32 256, 256
          %228 = vsyncadd %s221, %s227
          %s229 = smul.addr %s225, 64
          %s230 = scalar_lea.hbm %s0, %s229
          %s232 = sshll.u32 %s224, 4
          %s233 = int_to_ptr.vmem [resolvable:$true] %s232
          %235 = dma.hbm_to_vmem [thread:$0]  %s230, 256, %s233, %s221
        $region36: #{tpu_custom_call.1} parent=31 // pred_fallthru
          _
        // Predicated region
        $region37: #{tpu_custom_call.1} parent=31 // pred_check
          %p236 = pneg %p65
        $region38: #{tpu_custom_call.1} parent=31 // pred_check_branch
          %238 = sbr.rel (%p236) target = $region40
        $region39: #{tpu_custom_call.1} parent=31 // pred_region
          %s239 = sand.u32 %s19, 1
          %s240 = scalar_lea.sflag [#allocation7], %s239
          %s241 = sand.u32 %s55, 1
          %s242 = smul.addr %s241, 1024
          %s243 = scalar_lea.vmem [#allocation6], %s242
          %s244 = smul.u32 64, %s19
          %s246 = ssub.s32 16384, 16384
          %247 = vsyncadd %s240, %s246
          %s248 = smul.addr %s244, 4
          %s249 = smul.addr %s248, 64
          %s250 = scalar_lea.hbm %s1, %s249
          %s251 = sshll.u32 %s243, 4
          %s252 = int_to_ptr.vmem [resolvable:$true] %s251
          %257 = dma.hbm_to_vmem [thread:$0]  %s250, 16384, %s252, %s240, 256, 256, 16
        $region40: #{tpu_custom_call.1} parent=31 // pred_fallthru
          _
      $region32: #{tpu_custom_call.1} parent=5 // pred_fallthru
        _
      %p258 = scmp.le.s32.totalorder 1, %s19
      %p259 = scmp.lt.s32.totalorder %s19, 3
      %p260 = pnand %p258, %p259
      %p261 = pneg %p260
      // Predicated region
      $region41: #{tpu_custom_call.1} parent=5 // pred_check
        _
      $region42: #{tpu_custom_call.1} parent=5 // pred_check_branch
        %263 = sbr.rel (%p260) target = $region44
      $region43: #{tpu_custom_call.1} parent=5 // pred_region
        %s264 = ssub.s32 %s19, 1
        %s265 = sand.u32 %s32, 1
        %s266 = scalar_lea.sflag [#allocation4], %s265
        %s267 = sand.u32 %s32, 1
        %s268 = smul.addr %s267, 16
        %s269 = scalar_lea.vmem [#allocation3], %s268
        // Predicated region
        $region45: #{tpu_custom_call.1} parent=43 // pred_check
          %p270 = pneg %p45
        $region46: #{tpu_custom_call.1} parent=43 // pred_check_branch
          %272 = sbr.rel (%p270) target = $region48
        $region47: #{tpu_custom_call.1} parent=43 // pred_region
          %273 = dma.done %s266, 256
        $region48: #{tpu_custom_call.1} parent=43 // pred_fallthru
          _
        %s274 = sand.u32 %s24, 1
        %s275 = scalar_lea.sflag [#allocation7], %s274
        %s276 = sand.u32 %s58, 1
        %s277 = smul.addr %s276, 1024
        %s278 = scalar_lea.vmem [#allocation6], %s277
        // Predicated region
        $region49: #{tpu_custom_call.1} parent=43 // pred_check
          %p279 = pneg %p71
        $region50: #{tpu_custom_call.1} parent=43 // pred_check_branch
          %281 = sbr.rel (%p279) target = $region52
        $region51: #{tpu_custom_call.1} parent=43 // pred_region
          %282 = dma.done %s275, 16384
        $region52: #{tpu_custom_call.1} parent=43 // pred_fallthru
          _
        // Predicated region
        $region53: #{tpu_custom_call.1} parent=43 // pred_check
          %p283 = pneg %p134
        $region54: #{tpu_custom_call.1} parent=43 // pred_check_branch
          %285 = sbr.rel (%p283) target = $region56
        $region55: #{tpu_custom_call.1} parent=43 // pred_region
          %286 = dma.done [#allocation7], 4096
        $region56: #{tpu_custom_call.1} parent=43 // pred_fallthru
          _
        %s287 = sand.u32 %s32, 1
        %s288 = scalar_lea.sflag [#allocation4], %s287
        %s289 = sand.u32 %s32, 1
        %s290 = smul.addr %s289, 16
        %s291 = scalar_lea.vmem [#allocation3], %s290
        %p292 = pneg %p45
        %p293 = pneg %p42
        %s294 = sand.u32 %s24, 1
        %s295 = scalar_lea.sflag [#allocation7], %s294
        %s296 = sand.u32 %s58, 1
        %s297 = smul.addr %s296, 1024
        %s298 = scalar_lea.vmem [#allocation6], %s297
        %p299 = pneg %p71
        %p300 = pneg %p68
        %p301 = pneg %p92
        %p302 = pneg %p89
        %p303 = pneg %p113
        %p304 = pneg %p110
        %p305 = pneg %p134
        %p306 = pneg %p131
        %p307 = pneg %p155
        %p308 = pneg %p152
        %p309 = pneg %p176
        %p310 = pneg %p173
        %s311 = smul.u32 4, %s24
        %s312 = smul.u32 64, %s24
        %p314 = scmp.eq.s32.totalorder %s24, 0
        // Predicated region
        $region57: #{tpu_custom_call.1} parent=43 // pred_check
          %p315 = pneg %p314
        $region58: #{tpu_custom_call.1} parent=43 // pred_check_branch
          %317 = sbr.rel (%p315) target = $region60
        $region59: #{tpu_custom_call.1} parent=43 // pred_region
          %318 = vst [vmem:[#allocation2] sm:$0xff] 0.0
          %319 = vst [vmem:[#allocation2 + $0x8] sm:$0xff] 0.0
          %320 = vst [vmem:[#allocation2 + $0x10] sm:$0xff] 0.0
          %321 = vst [vmem:[#allocation2 + $0x18] sm:$0xff] 0.0
        $region60: #{tpu_custom_call.1} parent=43 // pred_fallthru
          _
        %v322 = vld [vmem:[#allocation2] sm:$0xff]
        %v323 = vld [vmem:[#allocation2 + $0x8] sm:$0xff]
        %v324 = vld [vmem:[#allocation2 + $0x10] sm:$0xff]
        %v325 = vld [vmem:[#allocation2 + $0x18] sm:$0xff]
        %v326 = vld [vmem:[%s269] sm:$0xff]
        %v327 = vld [vmem:[%s269 + $0x8] sm:$0xff]
        %v328 = vld [vmem:[%s278] sm:$0xff]
        %v329 = vld [vmem:[%s278 + $0x8] sm:$0xff]
        %v330 = vld [vmem:[%s278 + $0x10] sm:$0xff]
        %v331 = vld [vmem:[%s278 + $0x18] sm:$0xff]
        %v332 = vld [vmem:[%s278 + $0x20] sm:$0xff]
        %v333 = vld [vmem:[%s278 + $0x28] sm:$0xff]
        %v334 = vld [vmem:[%s278 + $0x30] sm:$0xff]
        %v335 = vld [vmem:[%s278 + $0x38] sm:$0xff]
        %v336 = vld [vmem:[%s278 + $0x40] sm:$0xff]
        %v337 = vld [vmem:[%s278 + $0x48] sm:$0xff]
        %v338 = vld [vmem:[%s278 + $0x50] sm:$0xff]
        %v339 = vld [vmem:[%s278 + $0x58] sm:$0xff]
        %v340 = vld [vmem:[%s278 + $0x60] sm:$0xff]
        %v341 = vld [vmem:[%s278 + $0x68] sm:$0xff]
        %v342 = vld [vmem:[%s278 + $0x70] sm:$0xff]
        %v343 = vld [vmem:[%s278 + $0x78] sm:$0xff]
        %v344 = vld [vmem:[%s278 + $0x80] sm:$0xff]
        %v345 = vld [vmem:[%s278 + $0x88] sm:$0xff]
        %v346 = vld [vmem:[%s278 + $0x90] sm:$0xff]
        %v347 = vld [vmem:[%s278 + $0x98] sm:$0xff]
        %v348 = vld [vmem:[%s278 + $0xa0] sm:$0xff]
        %v349 = vld [vmem:[%s278 + $0xa8] sm:$0xff]
        %v350 = vld [vmem:[%s278 + $0xb0] sm:$0xff]
        %v351 = vld [vmem:[%s278 + $0xb8] sm:$0xff]
        %v352 = vld [vmem:[%s278 + $0xc0] sm:$0xff]
        %v353 = vld [vmem:[%s278 + $0xc8] sm:$0xff]
        %v354 = vld [vmem:[%s278 + $0xd0] sm:$0xff]
        %v355 = vld [vmem:[%s278 + $0xd8] sm:$0xff]
        %v356 = vld [vmem:[%s278 + $0xe0] sm:$0xff]
        %v357 = vld [vmem:[%s278 + $0xe8] sm:$0xff]
        %v358 = vld [vmem:[%s278 + $0xf0] sm:$0xff]
        %v359 = vld [vmem:[%s278 + $0xf8] sm:$0xff]
        %v360 = vld [vmem:[%s278 + $0x100] sm:$0xff]
        %v361 = vld [vmem:[%s278 + $0x108] sm:$0xff]
        %v362 = vld [vmem:[%s278 + $0x110] sm:$0xff]
        %v363 = vld [vmem:[%s278 + $0x118] sm:$0xff]
        %v364 = vld [vmem:[%s278 + $0x120] sm:$0xff]
        %v365 = vld [vmem:[%s278 + $0x128] sm:$0xff]
        %v366 = vld [vmem:[%s278 + $0x130] sm:$0xff]
        %v367 = vld [vmem:[%s278 + $0x138] sm:$0xff]
        %v368 = vld [vmem:[%s278 + $0x140] sm:$0xff]
        %v369 = vld [vmem:[%s278 + $0x148] sm:$0xff]
        %v370 = vld [vmem:[%s278 + $0x150] sm:$0xff]
        %v371 = vld [vmem:[%s278 + $0x158] sm:$0xff]
        %v372 = vld [vmem:[%s278 + $0x160] sm:$0xff]
        %v373 = vld [vmem:[%s278 + $0x168] sm:$0xff]
        %v374 = vld [vmem:[%s278 + $0x170] sm:$0xff]
        %v375 = vld [vmem:[%s278 + $0x178] sm:$0xff]
        %v376 = vld [vmem:[%s278 + $0x180] sm:$0xff]
        %v377 = vld [vmem:[%s278 + $0x188] sm:$0xff]
        %v378 = vld [vmem:[%s278 + $0x190] sm:$0xff]
        %v379 = vld [vmem:[%s278 + $0x198] sm:$0xff]
        %v380 = vld [vmem:[%s278 + $0x1a0] sm:$0xff]
        %v381 = vld [vmem:[%s278 + $0x1a8] sm:$0xff]
        %v382 = vld [vmem:[%s278 + $0x1b0] sm:$0xff]
        %v383 = vld [vmem:[%s278 + $0x1b8] sm:$0xff]
        %v384 = vld [vmem:[%s278 + $0x1c0] sm:$0xff]
        %v385 = vld [vmem:[%s278 + $0x1c8] sm:$0xff]
        %v386 = vld [vmem:[%s278 + $0x1d0] sm:$0xff]
        %v387 = vld [vmem:[%s278 + $0x1d8] sm:$0xff]
        %v388 = vld [vmem:[%s278 + $0x1e0] sm:$0xff]
        %v389 = vld [vmem:[%s278 + $0x1e8] sm:$0xff]
        %v390 = vld [vmem:[%s278 + $0x1f0] sm:$0xff]
        %v391 = vld [vmem:[%s278 + $0x1f8] sm:$0xff]
        %v392 = vld [vmem:[%s278 + $0x200] sm:$0xff]
        %v393 = vld [vmem:[%s278 + $0x208] sm:$0xff]
        %v394 = vld [vmem:[%s278 + $0x210] sm:$0xff]
        %v395 = vld [vmem:[%s278 + $0x218] sm:$0xff]
        %v396 = vld [vmem:[%s278 + $0x220] sm:$0xff]
        %v397 = vld [vmem:[%s278 + $0x228] sm:$0xff]
        %v398 = vld [vmem:[%s278 + $0x230] sm:$0xff]
        %v399 = vld [vmem:[%s278 + $0x238] sm:$0xff]
        %v400 = vld [vmem:[%s278 + $0x240] sm:$0xff]
        %v401 = vld [vmem:[%s278 + $0x248] sm:$0xff]
        %v402 = vld [vmem:[%s278 + $0x250] sm:$0xff]
        %v403 = vld [vmem:[%s278 + $0x258] sm:$0xff]
        %v404 = vld [vmem:[%s278 + $0x260] sm:$0xff]
        %v405 = vld [vmem:[%s278 + $0x268] sm:$0xff]
        %v406 = vld [vmem:[%s278 + $0x270] sm:$0xff]
        %v407 = vld [vmem:[%s278 + $0x278] sm:$0xff]
        %v408 = vld [vmem:[%s278 + $0x280] sm:$0xff]
        %v409 = vld [vmem:[%s278 + $0x288] sm:$0xff]
        %v410 = vld [vmem:[%s278 + $0x290] sm:$0xff]
        %v411 = vld [vmem:[%s278 + $0x298] sm:$0xff]
        %v412 = vld [vmem:[%s278 + $0x2a0] sm:$0xff]
        %v413 = vld [vmem:[%s278 + $0x2a8] sm:$0xff]
        %v414 = vld [vmem:[%s278 + $0x2b0] sm:$0xff]
        %v415 = vld [vmem:[%s278 + $0x2b8] sm:$0xff]
        %v416 = vld [vmem:[%s278 + $0x2c0] sm:$0xff]
        %v417 = vld [vmem:[%s278 + $0x2c8] sm:$0xff]
        %v418 = vld [vmem:[%s278 + $0x2d0] sm:$0xff]
        %v419 = vld [vmem:[%s278 + $0x2d8] sm:$0xff]
        %v420 = vld [vmem:[%s278 + $0x2e0] sm:$0xff]
        %v421 = vld [vmem:[%s278 + $0x2e8] sm:$0xff]
        %v422 = vld [vmem:[%s278 + $0x2f0] sm:$0xff]
        %v423 = vld [vmem:[%s278 + $0x2f8] sm:$0xff]
        %v424 = vld [vmem:[%s278 + $0x300] sm:$0xff]
        %v425 = vld [vmem:[%s278 + $0x308] sm:$0xff]
        %v426 = vld [vmem:[%s278 + $0x310] sm:$0xff]
        %v427 = vld [vmem:[%s278 + $0x318] sm:$0xff]
        %v428 = vld [vmem:[%s278 + $0x320] sm:$0xff]
        %v429 = vld [vmem:[%s278 + $0x328] sm:$0xff]
        %v430 = vld [vmem:[%s278 + $0x330] sm:$0xff]
        %v431 = vld [vmem:[%s278 + $0x338] sm:$0xff]
        %v432 = vld [vmem:[%s278 + $0x340] sm:$0xff]
        %v433 = vld [vmem:[%s278 + $0x348] sm:$0xff]
        %v434 = vld [vmem:[%s278 + $0x350] sm:$0xff]
        %v435 = vld [vmem:[%s278 + $0x358] sm:$0xff]
        %v436 = vld [vmem:[%s278 + $0x360] sm:$0xff]
        %v437 = vld [vmem:[%s278 + $0x368] sm:$0xff]
        %v438 = vld [vmem:[%s278 + $0x370] sm:$0xff]
        %v439 = vld [vmem:[%s278 + $0x378] sm:$0xff]
        %v440 = vld [vmem:[%s278 + $0x380] sm:$0xff]
        %v441 = vld [vmem:[%s278 + $0x388] sm:$0xff]
        %v442 = vld [vmem:[%s278 + $0x390] sm:$0xff]
        %v443 = vld [vmem:[%s278 + $0x398] sm:$0xff]
        %v444 = vld [vmem:[%s278 + $0x3a0] sm:$0xff]
        %v445 = vld [vmem:[%s278 + $0x3a8] sm:$0xff]
        %v446 = vld [vmem:[%s278 + $0x3b0] sm:$0xff]
        %v447 = vld [vmem:[%s278 + $0x3b8] sm:$0xff]
        %v448 = vld [vmem:[%s278 + $0x3c0] sm:$0xff]
        %v449 = vld [vmem:[%s278 + $0x3c8] sm:$0xff]
        %v450 = vld [vmem:[%s278 + $0x3d0] sm:$0xff]
        %v451 = vld [vmem:[%s278 + $0x3d8] sm:$0xff]
        %v452 = vld [vmem:[%s278 + $0x3e0] sm:$0xff]
        %v453 = vld [vmem:[%s278 + $0x3e8] sm:$0xff]
        %v454 = vld [vmem:[%s278 + $0x3f0] sm:$0xff]
        %v455 = vld [vmem:[%s278 + $0x3f8] sm:$0xff]
        %v458 = vunpack.c.l.b16 %v326
        %v459 = vunpack.c.h.b16 %v326
        %v460 = vunpack.c.l.b16 %v327
        %v461 = vunpack.c.h.b16 %v327
        %v462 = vpack.c.b16 %v458, %v458
        %v463 = vpack.c.b16 %v459, %v459
        %v464 = vpack.c.b16 %v460, %v460
        %v465 = vpack.c.b16 %v461, %v461
        %v598 = vunpack.c.l.b16 %v328
        %v599 = vunpack.c.h.b16 %v328
        %v600 = vunpack.c.l.b16 %v329
        %v601 = vunpack.c.h.b16 %v329
        %v602 = vunpack.c.l.b16 %v330
        %v603 = vunpack.c.h.b16 %v330
        %v604 = vunpack.c.l.b16 %v331
        %v605 = vunpack.c.h.b16 %v331
        %v606 = vunpack.c.l.b16 %v332
        %v607 = vunpack.c.h.b16 %v332
        %v608 = vunpack.c.l.b16 %v333
        %v609 = vunpack.c.h.b16 %v333
        %v610 = vunpack.c.l.b16 %v334
        %v611 = vunpack.c.h.b16 %v334
        %v612 = vunpack.c.l.b16 %v335
        %v613 = vunpack.c.h.b16 %v335
        %v614 = vunpack.c.l.b16 %v336
        %v615 = vunpack.c.h.b16 %v336
        %v616 = vunpack.c.l.b16 %v337
        %v617 = vunpack.c.h.b16 %v337
        %v618 = vunpack.c.l.b16 %v338
        %v619 = vunpack.c.h.b16 %v338
        %v620 = vunpack.c.l.b16 %v339
        %v621 = vunpack.c.h.b16 %v339
        %v622 = vunpack.c.l.b16 %v340
        %v623 = vunpack.c.h.b16 %v340
        %v624 = vunpack.c.l.b16 %v341
        %v625 = vunpack.c.h.b16 %v341
        %v626 = vunpack.c.l.b16 %v342
        %v627 = vunpack.c.h.b16 %v342
        %v628 = vunpack.c.l.b16 %v343
        %v629 = vunpack.c.h.b16 %v343
        %v630 = vunpack.c.l.b16 %v344
        %v631 = vunpack.c.h.b16 %v344
        %v632 = vunpack.c.l.b16 %v345
        %v633 = vunpack.c.h.b16 %v345
        %v634 = vunpack.c.l.b16 %v346
        %v635 = vunpack.c.h.b16 %v346
        %v636 = vunpack.c.l.b16 %v347
        %v637 = vunpack.c.h.b16 %v347
        %v638 = vunpack.c.l.b16 %v348
        %v639 = vunpack.c.h.b16 %v348
        %v640 = vunpack.c.l.b16 %v349
        %v641 = vunpack.c.h.b16 %v349
        %v642 = vunpack.c.l.b16 %v350
        %v643 = vunpack.c.h.b16 %v350
        %v644 = vunpack.c.l.b16 %v351
        %v645 = vunpack.c.h.b16 %v351
        %v646 = vunpack.c.l.b16 %v352
        %v647 = vunpack.c.h.b16 %v352
        %v648 = vunpack.c.l.b16 %v353
        %v649 = vunpack.c.h.b16 %v353
        %v650 = vunpack.c.l.b16 %v354
        %v651 = vunpack.c.h.b16 %v354
        %v652 = vunpack.c.l.b16 %v355
        %v653 = vunpack.c.h.b16 %v355
        %v654 = vunpack.c.l.b16 %v356
        %v655 = vunpack.c.h.b16 %v356
        %v656 = vunpack.c.l.b16 %v357
        %v657 = vunpack.c.h.b16 %v357
        %v658 = vunpack.c.l.b16 %v358
        %v659 = vunpack.c.h.b16 %v358
        %v660 = vunpack.c.l.b16 %v359
        %v661 = vunpack.c.h.b16 %v359
        %v662 = vunpack.c.l.b16 %v360
        %v663 = vunpack.c.h.b16 %v360
        %v664 = vunpack.c.l.b16 %v361
        %v665 = vunpack.c.h.b16 %v361
        %v666 = vunpack.c.l.b16 %v362
        %v667 = vunpack.c.h.b16 %v362
        %v668 = vunpack.c.l.b16 %v363
        %v669 = vunpack.c.h.b16 %v363
        %v670 = vunpack.c.l.b16 %v364
        %v671 = vunpack.c.h.b16 %v364
        %v672 = vunpack.c.l.b16 %v365
        %v673 = vunpack.c.h.b16 %v365
        %v674 = vunpack.c.l.b16 %v366
        %v675 = vunpack.c.h.b16 %v366
        %v676 = vunpack.c.l.b16 %v367
        %v677 = vunpack.c.h.b16 %v367
        %v678 = vunpack.c.l.b16 %v368
        %v679 = vunpack.c.h.b16 %v368
        %v680 = vunpack.c.l.b16 %v369
        %v681 = vunpack.c.h.b16 %v369
        %v682 = vunpack.c.l.b16 %v370
        %v683 = vunpack.c.h.b16 %v370
        %v684 = vunpack.c.l.b16 %v371
        %v685 = vunpack.c.h.b16 %v371
        %v686 = vunpack.c.l.b16 %v372
        %v687 = vunpack.c.h.b16 %v372
        %v688 = vunpack.c.l.b16 %v373
        %v689 = vunpack.c.h.b16 %v373
        %v690 = vunpack.c.l.b16 %v374
        %v691 = vunpack.c.h.b16 %v374
        %v692 = vunpack.c.l.b16 %v375
        %v693 = vunpack.c.h.b16 %v375
        %v694 = vunpack.c.l.b16 %v376
        %v695 = vunpack.c.h.b16 %v376
        %v696 = vunpack.c.l.b16 %v377
        %v697 = vunpack.c.h.b16 %v377
        %v698 = vunpack.c.l.b16 %v378
        %v699 = vunpack.c.h.b16 %v378
        %v700 = vunpack.c.l.b16 %v379
        %v701 = vunpack.c.h.b16 %v379
        %v702 = vunpack.c.l.b16 %v380
        %v703 = vunpack.c.h.b16 %v380
        %v704 = vunpack.c.l.b16 %v381
        %v705 = vunpack.c.h.b16 %v381
        %v706 = vunpack.c.l.b16 %v382
        %v707 = vunpack.c.h.b16 %v382
        %v708 = vunpack.c.l.b16 %v383
        %v709 = vunpack.c.h.b16 %v383
        %v710 = vunpack.c.l.b16 %v384
        %v711 = vunpack.c.h.b16 %v384
        %v712 = vunpack.c.l.b16 %v385
        %v713 = vunpack.c.h.b16 %v385
        %v714 = vunpack.c.l.b16 %v386
        %v715 = vunpack.c.h.b16 %v386
        %v716 = vunpack.c.l.b16 %v387
        %v717 = vunpack.c.h.b16 %v387
        %v718 = vunpack.c.l.b16 %v388
        %v719 = vunpack.c.h.b16 %v388
        %v720 = vunpack.c.l.b16 %v389
        %v721 = vunpack.c.h.b16 %v389
        %v722 = vunpack.c.l.b16 %v390
        %v723 = vunpack.c.h.b16 %v390
        %v724 = vunpack.c.l.b16 %v391
        %v725 = vunpack.c.h.b16 %v391
        %v726 = vunpack.c.l.b16 %v392
        %v727 = vunpack.c.h.b16 %v392
        %v728 = vunpack.c.l.b16 %v393
        %v729 = vunpack.c.h.b16 %v393
        %v730 = vunpack.c.l.b16 %v394
        %v731 = vunpack.c.h.b16 %v394
        %v732 = vunpack.c.l.b16 %v395
        %v733 = vunpack.c.h.b16 %v395
        %v734 = vunpack.c.l.b16 %v396
        %v735 = vunpack.c.h.b16 %v396
        %v736 = vunpack.c.l.b16 %v397
        %v737 = vunpack.c.h.b16 %v397
        %v738 = vunpack.c.l.b16 %v398
        %v739 = vunpack.c.h.b16 %v398
        %v740 = vunpack.c.l.b16 %v399
        %v741 = vunpack.c.h.b16 %v399
        %v742 = vunpack.c.l.b16 %v400
        %v743 = vunpack.c.h.b16 %v400
        %v744 = vunpack.c.l.b16 %v401
        %v745 = vunpack.c.h.b16 %v401
        %v746 = vunpack.c.l.b16 %v402
        %v747 = vunpack.c.h.b16 %v402
        %v748 = vunpack.c.l.b16 %v403
        %v749 = vunpack.c.h.b16 %v403
        %v750 = vunpack.c.l.b16 %v404
        %v751 = vunpack.c.h.b16 %v404
        %v752 = vunpack.c.l.b16 %v405
        %v753 = vunpack.c.h.b16 %v405
        %v754 = vunpack.c.l.b16 %v406
        %v755 = vunpack.c.h.b16 %v406
        %v756 = vunpack.c.l.b16 %v407
        %v757 = vunpack.c.h.b16 %v407
        %v758 = vunpack.c.l.b16 %v408
        %v759 = vunpack.c.h.b16 %v408
        %v760 = vunpack.c.l.b16 %v409
        %v761 = vunpack.c.h.b16 %v409
        %v762 = vunpack.c.l.b16 %v410
        %v763 = vunpack.c.h.b16 %v410
        %v764 = vunpack.c.l.b16 %v411
        %v765 = vunpack.c.h.b16 %v411
        %v766 = vunpack.c.l.b16 %v412
        %v767 = vunpack.c.h.b16 %v412
        %v768 = vunpack.c.l.b16 %v413
        %v769 = vunpack.c.h.b16 %v413
        %v770 = vunpack.c.l.b16 %v414
        %v771 = vunpack.c.h.b16 %v414
        %v772 = vunpack.c.l.b16 %v415
        %v773 = vunpack.c.h.b16 %v415
        %v774 = vunpack.c.l.b16 %v416
        %v775 = vunpack.c.h.b16 %v416
        %v776 = vunpack.c.l.b16 %v417
        %v777 = vunpack.c.h.b16 %v417
        %v778 = vunpack.c.l.b16 %v418
        %v779 = vunpack.c.h.b16 %v418
        %v780 = vunpack.c.l.b16 %v419
        %v781 = vunpack.c.h.b16 %v419
        %v782 = vunpack.c.l.b16 %v420
        %v783 = vunpack.c.h.b16 %v420
        %v784 = vunpack.c.l.b16 %v421
        %v785 = vunpack.c.h.b16 %v421
        %v786 = vunpack.c.l.b16 %v422
        %v787 = vunpack.c.h.b16 %v422
        %v788 = vunpack.c.l.b16 %v423
        %v789 = vunpack.c.h.b16 %v423
        %v790 = vunpack.c.l.b16 %v424
        %v791 = vunpack.c.h.b16 %v424
        %v792 = vunpack.c.l.b16 %v425
        %v793 = vunpack.c.h.b16 %v425
        %v794 = vunpack.c.l.b16 %v426
        %v795 = vunpack.c.h.b16 %v426
        %v796 = vunpack.c.l.b16 %v427
        %v797 = vunpack.c.h.b16 %v427
        %v798 = vunpack.c.l.b16 %v428
        %v799 = vunpack.c.h.b16 %v428
        %v800 = vunpack.c.l.b16 %v429
        %v801 = vunpack.c.h.b16 %v429
        %v802 = vunpack.c.l.b16 %v430
        %v803 = vunpack.c.h.b16 %v430
        %v804 = vunpack.c.l.b16 %v431
        %v805 = vunpack.c.h.b16 %v431
        %v806 = vunpack.c.l.b16 %v432
        %v807 = vunpack.c.h.b16 %v432
        %v808 = vunpack.c.l.b16 %v433
        %v809 = vunpack.c.h.b16 %v433
        %v810 = vunpack.c.l.b16 %v434
        %v811 = vunpack.c.h.b16 %v434
        %v812 = vunpack.c.l.b16 %v435
        %v813 = vunpack.c.h.b16 %v435
        %v814 = vunpack.c.l.b16 %v436
        %v815 = vunpack.c.h.b16 %v436
        %v816 = vunpack.c.l.b16 %v437
        %v817 = vunpack.c.h.b16 %v437
        %v818 = vunpack.c.l.b16 %v438
        %v819 = vunpack.c.h.b16 %v438
        %v820 = vunpack.c.l.b16 %v439
        %v821 = vunpack.c.h.b16 %v439
        %v822 = vunpack.c.l.b16 %v440
        %v823 = vunpack.c.h.b16 %v440
        %v824 = vunpack.c.l.b16 %v441
        %v825 = vunpack.c.h.b16 %v441
        %v826 = vunpack.c.l.b16 %v442
        %v827 = vunpack.c.h.b16 %v442
        %v828 = vunpack.c.l.b16 %v443
        %v829 = vunpack.c.h.b16 %v443
        %v830 = vunpack.c.l.b16 %v444
        %v831 = vunpack.c.h.b16 %v444
        %v832 = vunpack.c.l.b16 %v445
        %v833 = vunpack.c.h.b16 %v445
        %v834 = vunpack.c.l.b16 %v446
        %v835 = vunpack.c.h.b16 %v446
        %v836 = vunpack.c.l.b16 %v447
        %v837 = vunpack.c.h.b16 %v447
        %v838 = vunpack.c.l.b16 %v448
        %v839 = vunpack.c.h.b16 %v448
        %v840 = vunpack.c.l.b16 %v449
        %v841 = vunpack.c.h.b16 %v449
        %v842 = vunpack.c.l.b16 %v450
        %v843 = vunpack.c.h.b16 %v450
        %v844 = vunpack.c.l.b16 %v451
        %v845 = vunpack.c.h.b16 %v451
        %v846 = vunpack.c.l.b16 %v452
        %v847 = vunpack.c.h.b16 %v452
        %v848 = vunpack.c.l.b16 %v453
        %v849 = vunpack.c.h.b16 %v453
        %v850 = vunpack.c.l.b16 %v454
        %v851 = vunpack.c.h.b16 %v454
        %v852 = vunpack.c.l.b16 %v455
        %v853 = vunpack.c.h.b16 %v455
        %v854 = vpack.c.b16 %v602, %v598
        %v855 = vpack.c.b16 %v603, %v599
        %v856 = vpack.c.b16 %v604, %v600
        %v857 = vpack.c.b16 %v605, %v601
        %v858 = vpack.c.b16 %v610, %v606
        %v859 = vpack.c.b16 %v611, %v607
        %v860 = vpack.c.b16 %v612, %v608
        %v861 = vpack.c.b16 %v613, %v609
        %v862 = vpack.c.b16 %v618, %v614
        %v863 = vpack.c.b16 %v619, %v615
        %v864 = vpack.c.b16 %v620, %v616
        %v865 = vpack.c.b16 %v621, %v617
        %v866 = vpack.c.b16 %v626, %v622
        %v867 = vpack.c.b16 %v627, %v623
        %v868 = vpack.c.b16 %v628, %v624
        %v869 = vpack.c.b16 %v629, %v625
        %v870 = vpack.c.b16 %v634, %v630
        %v871 = vpack.c.b16 %v635, %v631
        %v872 = vpack.c.b16 %v636, %v632
        %v873 = vpack.c.b16 %v637, %v633
        %v874 = vpack.c.b16 %v642, %v638
        %v875 = vpack.c.b16 %v643, %v639
        %v876 = vpack.c.b16 %v644, %v640
        %v877 = vpack.c.b16 %v645, %v641
        %v878 = vpack.c.b16 %v650, %v646
        %v879 = vpack.c.b16 %v651, %v647
        %v880 = vpack.c.b16 %v652, %v648
        %v881 = vpack.c.b16 %v653, %v649
        %v882 = vpack.c.b16 %v658, %v654
        %v883 = vpack.c.b16 %v659, %v655
        %v884 = vpack.c.b16 %v660, %v656
        %v885 = vpack.c.b16 %v661, %v657
        %v886 = vpack.c.b16 %v666, %v662
        %v887 = vpack.c.b16 %v667, %v663
        %v888 = vpack.c.b16 %v668, %v664
        %v889 = vpack.c.b16 %v669, %v665
        %v890 = vpack.c.b16 %v674, %v670
        %v891 = vpack.c.b16 %v675, %v671
        %v892 = vpack.c.b16 %v676, %v672
        %v893 = vpack.c.b16 %v677, %v673
        %v894 = vpack.c.b16 %v682, %v678
        %v895 = vpack.c.b16 %v683, %v679
        %v896 = vpack.c.b16 %v684, %v680
        %v897 = vpack.c.b16 %v685, %v681
        %v898 = vpack.c.b16 %v690, %v686
        %v899 = vpack.c.b16 %v691, %v687
        %v900 = vpack.c.b16 %v692, %v688
        %v901 = vpack.c.b16 %v693, %v689
        %v902 = vpack.c.b16 %v698, %v694
        %v903 = vpack.c.b16 %v699, %v695
        %v904 = vpack.c.b16 %v700, %v696
        %v905 = vpack.c.b16 %v701, %v697
        %v906 = vpack.c.b16 %v706, %v702
        %v907 = vpack.c.b16 %v707, %v703
        %v908 = vpack.c.b16 %v708, %v704
        %v909 = vpack.c.b16 %v709, %v705
        %v910 = vpack.c.b16 %v714, %v710
        %v911 = vpack.c.b16 %v715, %v711
        %v912 = vpack.c.b16 %v716, %v712
        %v913 = vpack.c.b16 %v717, %v713
        %v914 = vpack.c.b16 %v722, %v718
        %v915 = vpack.c.b16 %v723, %v719
        %v916 = vpack.c.b16 %v724, %v720
        %v917 = vpack.c.b16 %v725, %v721
        %v918 = vpack.c.b16 %v730, %v726
        %v919 = vpack.c.b16 %v731, %v727
        %v920 = vpack.c.b16 %v732, %v728
        %v921 = vpack.c.b16 %v733, %v729
        %v922 = vpack.c.b16 %v738, %v734
        %v923 = vpack.c.b16 %v739, %v735
        %v924 = vpack.c.b16 %v740, %v736
        %v925 = vpack.c.b16 %v741, %v737
        %v926 = vpack.c.b16 %v746, %v742
        %v927 = vpack.c.b16 %v747, %v743
        %v928 = vpack.c.b16 %v748, %v744
        %v929 = vpack.c.b16 %v749, %v745
        %v930 = vpack.c.b16 %v754, %v750
        %v931 = vpack.c.b16 %v755, %v751
        %v932 = vpack.c.b16 %v756, %v752
        %v933 = vpack.c.b16 %v757, %v753
        %v934 = vpack.c.b16 %v762, %v758
        %v935 = vpack.c.b16 %v763, %v759
        %v936 = vpack.c.b16 %v764, %v760
        %v937 = vpack.c.b16 %v765, %v761
        %v938 = vpack.c.b16 %v770, %v766
        %v939 = vpack.c.b16 %v771, %v767
        %v940 = vpack.c.b16 %v772, %v768
        %v941 = vpack.c.b16 %v773, %v769
        %v942 = vpack.c.b16 %v778, %v774
        %v943 = vpack.c.b16 %v779, %v775
        %v944 = vpack.c.b16 %v780, %v776
        %v945 = vpack.c.b16 %v781, %v777
        %v946 = vpack.c.b16 %v786, %v782
        %v947 = vpack.c.b16 %v787, %v783
        %v948 = vpack.c.b16 %v788, %v784
        %v949 = vpack.c.b16 %v789, %v785
        %v950 = vpack.c.b16 %v794, %v790
        %v951 = vpack.c.b16 %v795, %v791
        %v952 = vpack.c.b16 %v796, %v792
        %v953 = vpack.c.b16 %v797, %v793
        %v954 = vpack.c.b16 %v802, %v798
        %v955 = vpack.c.b16 %v803, %v799
        %v956 = vpack.c.b16 %v804, %v800
        %v957 = vpack.c.b16 %v805, %v801
        %v958 = vpack.c.b16 %v810, %v806
        %v959 = vpack.c.b16 %v811, %v807
        %v960 = vpack.c.b16 %v812, %v808
        %v961 = vpack.c.b16 %v813, %v809
        %v962 = vpack.c.b16 %v818, %v814
        %v963 = vpack.c.b16 %v819, %v815
        %v964 = vpack.c.b16 %v820, %v816
        %v965 = vpack.c.b16 %v821, %v817
        %v966 = vpack.c.b16 %v826, %v822
        %v967 = vpack.c.b16 %v827, %v823
        %v968 = vpack.c.b16 %v828, %v824
        %v969 = vpack.c.b16 %v829, %v825
        %v970 = vpack.c.b16 %v834, %v830
        %v971 = vpack.c.b16 %v835, %v831
        %v972 = vpack.c.b16 %v836, %v832
        %v973 = vpack.c.b16 %v837, %v833
        %v974 = vpack.c.b16 %v842, %v838
        %v975 = vpack.c.b16 %v843, %v839
        %v976 = vpack.c.b16 %v844, %v840
        %v977 = vpack.c.b16 %v845, %v841
        %v978 = vpack.c.b16 %v850, %v846
        %v979 = vpack.c.b16 %v851, %v847
        %v980 = vpack.c.b16 %v852, %v848
        %v981 = vpack.c.b16 %v853, %v849
        %1110 = vmatprep.subr.bf16.mxu0 %v855
        %1111 = vmatpush1.bf16.msra.mxu0 %v854
        %1112 = vmatprep.subr.bf16.mxu0 %v859
        %1113 = vmatpush1.bf16.msra.mxu0 %v858
        %1114 = vmatprep.subr.bf16.mxu0 %v863
        %1115 = vmatpush1.bf16.msra.mxu0 %v862
        %1116 = vmatprep.subr.bf16.mxu0 %v867
        %1117 = vmatpush1.bf16.msra.mxu0 %v866
        %1118 = vmatprep.subr.bf16.mxu0 %v871
        %1119 = vmatpush1.bf16.msra.mxu0 %v870
        %1120 = vmatprep.subr.bf16.mxu0 %v875
        %1121 = vmatpush1.bf16.msra.mxu0 %v874
        %1122 = vmatprep.subr.bf16.mxu0 %v879
        %1123 = vmatpush1.bf16.msra.mxu0 %v878
        %1124 = vmatprep.subr.bf16.mxu0 %v883
        %1125 = vmatpush1.bf16.msra.mxu0 %v882
        %1126 = vmatprep.subr.bf16.mxu0 %v887
        %1127 = vmatpush1.bf16.msra.mxu0 %v886
        %1128 = vmatprep.subr.bf16.mxu0 %v891
        %1129 = vmatpush1.bf16.msra.mxu0 %v890
        %1130 = vmatprep.subr.bf16.mxu0 %v895
        %1131 = vmatpush1.bf16.msra.mxu0 %v894
        %1132 = vmatprep.subr.bf16.mxu0 %v899
        %1133 = vmatpush1.bf16.msra.mxu0 %v898
        %1134 = vmatprep.subr.bf16.mxu0 %v903
        %1135 = vmatpush1.bf16.msra.mxu0 %v902
        %1136 = vmatprep.subr.bf16.mxu0 %v907
        %1137 = vmatpush1.bf16.msra.mxu0 %v906
        %1138 = vmatprep.subr.bf16.mxu0 %v911
        %1139 = vmatpush1.bf16.msra.mxu0 %v910
        %1140 = vmatprep.subr.bf16.mxu0 %v915
        %1141 = vmatpush1.bf16.msra.mxu0 %v914
        %1142 = vmatprep.mubr.bf16.mxu0 %v463
        %1143 = vmatmul.mubr.bf16.gmra.mrb[0].mxu0 %v462
        %v1144 = vpop.f32.mrb[0].mxu0
        %v1145 = vadd.f32 0.0, %v1144
        %v1146 = vpop.f32.mrb[0].mxu0
        %v1147 = vadd.f32 0.0, %v1146
        %v1148 = vpop.f32.mrb[0].mxu0
        %v1149 = vpop.f32.mrb[0].mxu0
        %1150 = vdwg.mxu0
        %1151 = vmatprep.subr.bf16.mxu0 %v919
        %1152 = vmatpush1.bf16.msra.mxu0 %v918
        %1153 = vmatprep.subr.bf16.mxu0 %v923
        %1154 = vmatpush1.bf16.msra.mxu0 %v922
        %1155 = vmatprep.subr.bf16.mxu0 %v927
        %1156 = vmatpush1.bf16.msra.mxu0 %v926
        %1157 = vmatprep.subr.bf16.mxu0 %v931
        %1158 = vmatpush1.bf16.msra.mxu0 %v930
        %1159 = vmatprep.subr.bf16.mxu0 %v935
        %1160 = vmatpush1.bf16.msra.mxu0 %v934
        %1161 = vmatprep.subr.bf16.mxu0 %v939
        %1162 = vmatpush1.bf16.msra.mxu0 %v938
        %1163 = vmatprep.subr.bf16.mxu0 %v943
        %1164 = vmatpush1.bf16.msra.mxu0 %v942
        %1165 = vmatprep.subr.bf16.mxu0 %v947
        %1166 = vmatpush1.bf16.msra.mxu0 %v946
        %1167 = vmatprep.subr.bf16.mxu0 %v951
        %1168 = vmatpush1.bf16.msra.mxu0 %v950
        %1169 = vmatprep.subr.bf16.mxu0 %v955
        %1170 = vmatpush1.bf16.msra.mxu0 %v954
        %1171 = vmatprep.subr.bf16.mxu0 %v959
        %1172 = vmatpush1.bf16.msra.mxu0 %v958
        %1173 = vmatprep.subr.bf16.mxu0 %v963
        %1174 = vmatpush1.bf16.msra.mxu0 %v962
        %1175 = vmatprep.subr.bf16.mxu0 %v967
        %1176 = vmatpush1.bf16.msra.mxu0 %v966
        %1177 = vmatprep.subr.bf16.mxu0 %v971
        %1178 = vmatpush1.bf16.msra.mxu0 %v970
        %1179 = vmatprep.subr.bf16.mxu0 %v975
        %1180 = vmatpush1.bf16.msra.mxu0 %v974
        %1181 = vmatprep.subr.bf16.mxu0 %v979
        %1182 = vmatpush1.bf16.msra.mxu0 %v978
        %1183 = vmatprep.mubr.bf16.mxu0 %v465
        %1184 = vmatmul.mubr.bf16.gmra.mrb[0].mxu0 %v464
        %v1185 = vpop.f32.mrb[0].mxu0
        %v1186 = vadd.f32 %v1145, %v1185
        %v1187 = vpop.f32.mrb[0].mxu0
        %v1188 = vadd.f32 %v1147, %v1187
        %v1189 = vpop.f32.mrb[0].mxu0
        %v1190 = vpop.f32.mrb[0].mxu0
        %1191 = vdwg.mxu0
        %1192 = vmatprep.subr.bf16.mxu0 %v857
        %1193 = vmatpush1.bf16.msra.mxu0 %v856
        %1194 = vmatprep.subr.bf16.mxu0 %v861
        %1195 = vmatpush1.bf16.msra.mxu0 %v860
        %1196 = vmatprep.subr.bf16.mxu0 %v865
        %1197 = vmatpush1.bf16.msra.mxu0 %v864
        %1198 = vmatprep.subr.bf16.mxu0 %v869
        %1199 = vmatpush1.bf16.msra.mxu0 %v868
        %1200 = vmatprep.subr.bf16.mxu0 %v873
        %1201 = vmatpush1.bf16.msra.mxu0 %v872
        %1202 = vmatprep.subr.bf16.mxu0 %v877
        %1203 = vmatpush1.bf16.msra.mxu0 %v876
        %1204 = vmatprep.subr.bf16.mxu0 %v881
        %1205 = vmatpush1.bf16.msra.mxu0 %v880
        %1206 = vmatprep.subr.bf16.mxu0 %v885
        %1207 = vmatpush1.bf16.msra.mxu0 %v884
        %1208 = vmatprep.subr.bf16.mxu0 %v889
        %1209 = vmatpush1.bf16.msra.mxu0 %v888
        %1210 = vmatprep.subr.bf16.mxu0 %v893
        %1211 = vmatpush1.bf16.msra.mxu0 %v892
        %1212 = vmatprep.subr.bf16.mxu0 %v897
        %1213 = vmatpush1.bf16.msra.mxu0 %v896
        %1214 = vmatprep.subr.bf16.mxu0 %v901
        %1215 = vmatpush1.bf16.msra.mxu0 %v900
        %1216 = vmatprep.subr.bf16.mxu0 %v905
        %1217 = vmatpush1.bf16.msra.mxu0 %v904
        %1218 = vmatprep.subr.bf16.mxu0 %v909
        %1219 = vmatpush1.bf16.msra.mxu0 %v908
        %1220 = vmatprep.subr.bf16.mxu0 %v913
        %1221 = vmatpush1.bf16.msra.mxu0 %v912
        %1222 = vmatprep.subr.bf16.mxu0 %v917
        %1223 = vmatpush1.bf16.msra.mxu0 %v916
        %1224 = vmatprep.mubr.bf16.mxu0 %v463
        %1225 = vmatmul.mubr.bf16.gmra.mrb[0].mxu0 %v462
        %v1226 = vpop.f32.mrb[0].mxu0
        %v1227 = vadd.f32 0.0, %v1226
        %v1228 = vpop.f32.mrb[0].mxu0
        %v1229 = vadd.f32 0.0, %v1228
        %v1230 = vpop.f32.mrb[0].mxu0
        %v1231 = vpop.f32.mrb[0].mxu0
        %1232 = vdwg.mxu0
        %1233 = vmatprep.subr.bf16.mxu0 %v921
        %1234 = vmatpush1.bf16.msra.mxu0 %v920
        %1235 = vmatprep.subr.bf16.mxu0 %v925
        %1236 = vmatpush1.bf16.msra.mxu0 %v924
        %1237 = vmatprep.subr.bf16.mxu0 %v929
        %1238 = vmatpush1.bf16.msra.mxu0 %v928
        %1239 = vmatprep.subr.bf16.mxu0 %v933
        %1240 = vmatpush1.bf16.msra.mxu0 %v932
        %1241 = vmatprep.subr.bf16.mxu0 %v937
        %1242 = vmatpush1.bf16.msra.mxu0 %v936
        %1243 = vmatprep.subr.bf16.mxu0 %v941
        %1244 = vmatpush1.bf16.msra.mxu0 %v940
        %1245 = vmatprep.subr.bf16.mxu0 %v945
        %1246 = vmatpush1.bf16.msra.mxu0 %v944
        %1247 = vmatprep.subr.bf16.mxu0 %v949
        %1248 = vmatpush1.bf16.msra.mxu0 %v948
        %1249 = vmatprep.subr.bf16.mxu0 %v953
        %1250 = vmatpush1.bf16.msra.mxu0 %v952
        %1251 = vmatprep.subr.bf16.mxu0 %v957
        %1252 = vmatpush1.bf16.msra.mxu0 %v956
        %1253 = vmatprep.subr.bf16.mxu0 %v961
        %1254 = vmatpush1.bf16.msra.mxu0 %v960
        %1255 = vmatprep.subr.bf16.mxu0 %v965
        %1256 = vmatpush1.bf16.msra.mxu0 %v964
        %1257 = vmatprep.subr.bf16.mxu0 %v969
        %1258 = vmatpush1.bf16.msra.mxu0 %v968
        %1259 = vmatprep.subr.bf16.mxu0 %v973
        %1260 = vmatpush1.bf16.msra.mxu0 %v972
        %1261 = vmatprep.subr.bf16.mxu0 %v977
        %1262 = vmatpush1.bf16.msra.mxu0 %v976
        %1263 = vmatprep.subr.bf16.mxu0 %v981
        %1264 = vmatpush1.bf16.msra.mxu0 %v980
        %1265 = vmatprep.mubr.bf16.mxu0 %v465
        %1266 = vmatmul.mubr.bf16.gmra.mrb[0].mxu0 %v464
        %v1267 = vpop.f32.mrb[0].mxu0
        %v1268 = vadd.f32 %v1227, %v1267
        %v1269 = vpop.f32.mrb[0].mxu0
        %v1270 = vadd.f32 %v1229, %v1269
        %v1271 = vpop.f32.mrb[0].mxu0
        %v1272 = vpop.f32.mrb[0].mxu0
        %1273 = vdwg.mxu0
        %v1274 = vadd.f32 %v322, %v1186
        %v1275 = vadd.f32 %v323, %v1188
        %v1276 = vadd.f32 %v324, %v1268
        %v1277 = vadd.f32 %v325, %v1270
        %1278 = vst [vmem:[#allocation2] sm:$0xff] %v1274
        %1279 = vst [vmem:[#allocation2 + $0x8] sm:$0xff] %v1275
        %1280 = vst [vmem:[#allocation2 + $0x10] sm:$0xff] %v1276
        %1281 = vst [vmem:[#allocation2 + $0x18] sm:$0xff] %v1277
        %p1282 = scmp.eq.s32.totalorder %s24, 1
        // Predicated region
        $region61: #{tpu_custom_call.1} parent=43 // pred_check
          %p1283 = pneg %p1282
        $region62: #{tpu_custom_call.1} parent=43 // pred_check_branch
          %1285 = sbr.rel (%p1283) target = $region64
        $region63: #{tpu_custom_call.1} parent=43 // pred_region
          %v1286 = vld [vmem:[#allocation2] sm:$0xff]
          %v1287 = vld [vmem:[#allocation2 + $0x8] sm:$0xff]
          %v1288 = vld [vmem:[#allocation2 + $0x10] sm:$0xff]
          %v1289 = vld [vmem:[#allocation2 + $0x18] sm:$0xff]
          %v1290 = vrot.slane %v1286, 4
          %v1291 = vadd.f32 %v1286, %v1290
          %v1292 = vrot.slane %v1291, 2
          %v1293 = vadd.f32 %v1291, %v1292
          %v1294 = vrot.slane %v1293, 1
          %v1295 = vadd.f32 %v1293, %v1294
          %v1296 = vrot.slane %v1287, 4
          %v1297 = vadd.f32 %v1287, %v1296
          %v1298 = vrot.slane %v1297, 2
          %v1299 = vadd.f32 %v1297, %v1298
          %v1300 = vrot.slane %v1299, 1
          %v1301 = vadd.f32 %v1299, %v1300
          %v1302 = vrot.slane %v1288, 4
          %v1303 = vadd.f32 %v1288, %v1302
          %v1304 = vrot.slane %v1303, 2
          %v1305 = vadd.f32 %v1303, %v1304
          %v1306 = vrot.slane %v1305, 1
          %v1307 = vadd.f32 %v1305, %v1306
          %v1308 = vrot.slane %v1289, 4
          %v1309 = vadd.f32 %v1289, %v1308
          %v1310 = vrot.slane %v1309, 2
          %v1311 = vadd.f32 %v1309, %v1310
          %v1312 = vrot.slane %v1311, 1
          %v1313 = vadd.f32 %v1311, %v1312
          %v1314 = vmul.f32 %v1295, 0.125
          %v1315 = vmul.f32 %v1301, 0.125
          %v1316 = vmul.f32 %v1307, 0.125
          %v1317 = vmul.f32 %v1313, 0.125
          %v1318 = vmul.f32 %v1286, %v1286
          %v1319 = vmul.f32 %v1287, %v1287
          %v1320 = vmul.f32 %v1288, %v1288
          %v1321 = vmul.f32 %v1289, %v1289
          %v1322 = vrot.slane %v1318, 4
          %v1323 = vadd.f32 %v1318, %v1322
          %v1324 = vrot.slane %v1323, 2
          %v1325 = vadd.f32 %v1323, %v1324
          %v1326 = vrot.slane %v1325, 1
          %v1327 = vadd.f32 %v1325, %v1326
          %v1328 = vrot.slane %v1319, 4
          %v1329 = vadd.f32 %v1319, %v1328
          %v1330 = vrot.slane %v1329, 2
          %v1331 = vadd.f32 %v1329, %v1330
          %v1332 = vrot.slane %v1331, 1
          %v1333 = vadd.f32 %v1331, %v1332
          %v1334 = vrot.slane %v1320, 4
          %v1335 = vadd.f32 %v1320, %v1334
          %v1336 = vrot.slane %v1335, 2
          %v1337 = vadd.f32 %v1335, %v1336
          %v1338 = vrot.slane %v1337, 1
          %v1339 = vadd.f32 %v1337, %v1338
          %v1340 = vrot.slane %v1321, 4
          %v1341 = vadd.f32 %v1321, %v1340
          %v1342 = vrot.slane %v1341, 2
          %v1343 = vadd.f32 %v1341, %v1342
          %v1344 = vrot.slane %v1343, 1
          %v1345 = vadd.f32 %v1343, %v1344
          %v1346 = vmul.f32 %v1327, 0.125
          %v1347 = vmul.f32 %v1333, 0.125
          %v1348 = vmul.f32 %v1339, 0.125
          %v1349 = vmul.f32 %v1345, 0.125
          %v1350 = vmul.f32 %v1314, %v1314
          %v1351 = vmul.f32 %v1315, %v1315
          %v1352 = vmul.f32 %v1316, %v1316
          %v1353 = vmul.f32 %v1317, %v1317
          %v1354 = vsub.f32 %v1346, %v1350
          %v1355 = vsub.f32 %v1347, %v1351
          %v1356 = vsub.f32 %v1348, %v1352
          %v1357 = vsub.f32 %v1349, %v1353
          %v1358 = vsub.f32 %v1286, %v1314
          %v1359 = vsub.f32 %v1287, %v1315
          %v1360 = vsub.f32 %v1288, %v1316
          %v1361 = vsub.f32 %v1289, %v1317
          %v1362 = vadd.f32 %v1354, 1e-05
          %v1363 = vadd.f32 %v1355, 1e-05
          %v1364 = vadd.f32 %v1356, 1e-05
          %v1365 = vadd.f32 %v1357, 1e-05
          %v1366 = vrsqrt.pop %v1362
          %v1367 = vrsqrt.pop %v1363
          %v1368 = vrsqrt.pop %v1364
          %v1369 = vrsqrt.pop %v1365
          %v1370 = vmul.f32 %v1358, %v1366
          %v1371 = vmul.f32 %v1359, %v1367
          %v1372 = vmul.f32 %v1360, %v1368
          %v1373 = vmul.f32 %v1361, %v1369
          %v1374 = vld [vmem:[%s2] sm:$0xf]
          %v1376 = vlaneseq
          %v1377 = vshrl.u32 %v1376, 7
          %v1378 = vsub.s32 0, %v1377
          %v1379 = vrot.slane %v1374, %v1378
          %v1380 = vlaneseq
          %v1381 = vshrl.u32 %v1380, 7
          %v1382 = vsub.s32 1, %v1381
          %v1383 = vrot.slane %v1374, %v1382
          %v1384 = vlaneseq
          %v1385 = vshrl.u32 %v1384, 7
          %v1386 = vsub.s32 2, %v1385
          %v1387 = vrot.slane %v1374, %v1386
          %v1388 = vlaneseq
          %v1389 = vshrl.u32 %v1388, 7
          %v1390 = vsub.s32 3, %v1389
          %v1391 = vrot.slane %v1374, %v1390
          %v1396 = vmul.f32 %v1370, %v1379
          %v1397 = vmul.f32 %v1371, %v1383
          %v1398 = vmul.f32 %v1372, %v1387
          %v1399 = vmul.f32 %v1373, %v1391
          %v1400 = vld [vmem:[%s3] sm:$0xf]
          %v1402 = vlaneseq
          %v1403 = vshrl.u32 %v1402, 7
          %v1404 = vsub.s32 0, %v1403
          %v1405 = vrot.slane %v1400, %v1404
          %v1406 = vlaneseq
          %v1407 = vshrl.u32 %v1406, 7
          %v1408 = vsub.s32 1, %v1407
          %v1409 = vrot.slane %v1400, %v1408
          %v1410 = vlaneseq
          %v1411 = vshrl.u32 %v1410, 7
          %v1412 = vsub.s32 2, %v1411
          %v1413 = vrot.slane %v1400, %v1412
          %v1414 = vlaneseq
          %v1415 = vshrl.u32 %v1414, 7
          %v1416 = vsub.s32 3, %v1415
          %v1417 = vrot.slane %v1400, %v1416
          %v1422 = vadd.f32 %v1396, %v1405
          %v1423 = vadd.f32 %v1397, %v1409
          %v1424 = vadd.f32 %v1398, %v1413
          %v1425 = vadd.f32 %v1399, %v1417
          %v1426 = vpack.c.bf16 %v1422, %v1422
          %v1427 = vpack.c.bf16 %v1423, %v1423
          %v1428 = vpack.c.bf16 %v1424, %v1424
          %v1429 = vpack.c.bf16 %v1425, %v1425
          %v1430 = vld [vmem:[#allocation8] sm:$0xf]
          %v1431 = vld [vmem:[#allocation8 + $0x4] sm:$0xf]
          %v1432 = vld [vmem:[#allocation8 + $0x8] sm:$0xf]
          %v1433 = vld [vmem:[#allocation8 + $0xc] sm:$0xf]
          %v1434 = vld [vmem:[#allocation8 + $0x10] sm:$0xf]
          %v1435 = vld [vmem:[#allocation8 + $0x14] sm:$0xf]
          %v1436 = vld [vmem:[#allocation8 + $0x18] sm:$0xf]
          %v1437 = vld [vmem:[#allocation8 + $0x1c] sm:$0xf]
          %v1438 = vld [vmem:[#allocation8 + $0x20] sm:$0xf]
          %v1439 = vld [vmem:[#allocation8 + $0x24] sm:$0xf]
          %v1440 = vld [vmem:[#allocation8 + $0x28] sm:$0xf]
          %v1441 = vld [vmem:[#allocation8 + $0x2c] sm:$0xf]
          %v1442 = vld [vmem:[#allocation8 + $0x30] sm:$0xf]
          %v1443 = vld [vmem:[#allocation8 + $0x34] sm:$0xf]
          %v1444 = vld [vmem:[#allocation8 + $0x38] sm:$0xf]
          %v1445 = vld [vmem:[#allocation8 + $0x3c] sm:$0xf]
          %v1446 = vld [vmem:[#allocation8 + $0x40] sm:$0xf]
          %v1447 = vld [vmem:[#allocation8 + $0x44] sm:$0xf]
          %v1448 = vld [vmem:[#allocation8 + $0x48] sm:$0xf]
          %v1449 = vld [vmem:[#allocation8 + $0x4c] sm:$0xf]
          %v1450 = vld [vmem:[#allocation8 + $0x50] sm:$0xf]
          %v1451 = vld [vmem:[#allocation8 + $0x54] sm:$0xf]
          %v1452 = vld [vmem:[#allocation8 + $0x58] sm:$0xf]
          %v1453 = vld [vmem:[#allocation8 + $0x5c] sm:$0xf]
          %v1454 = vld [vmem:[#allocation8 + $0x60] sm:$0xf]
          %v1455 = vld [vmem:[#allocation8 + $0x64] sm:$0xf]
          %v1456 = vld [vmem:[#allocation8 + $0x68] sm:$0xf]
          %v1457 = vld [vmem:[#allocation8 + $0x6c] sm:$0xf]
          %v1458 = vld [vmem:[#allocation8 + $0x70] sm:$0xf]
          %v1459 = vld [vmem:[#allocation8 + $0x74] sm:$0xf]
          %v1460 = vld [vmem:[#allocation8 + $0x78] sm:$0xf]
          %v1461 = vld [vmem:[#allocation8 + $0x7c] sm:$0xf]
          %v1462 = vld [vmem:[#allocation8 + $0x80] sm:$0xf]
          %v1463 = vld [vmem:[#allocation8 + $0x84] sm:$0xf]
          %v1464 = vld [vmem:[#allocation8 + $0x88] sm:$0xf]
          %v1465 = vld [vmem:[#allocation8 + $0x8c] sm:$0xf]
          %v1466 = vld [vmem:[#allocation8 + $0x90] sm:$0xf]
          %v1467 = vld [vmem:[#allocation8 + $0x94] sm:$0xf]
          %v1468 = vld [vmem:[#allocation8 + $0x98] sm:$0xf]
          %v1469 = vld [vmem:[#allocation8 + $0x9c] sm:$0xf]
          %v1470 = vld [vmem:[#allocation8 + $0xa0] sm:$0xf]
          %v1471 = vld [vmem:[#allocation8 + $0xa4] sm:$0xf]
          %v1472 = vld [vmem:[#allocation8 + $0xa8] sm:$0xf]
          %v1473 = vld [vmem:[#allocation8 + $0xac] sm:$0xf]
          %v1474 = vld [vmem:[#allocation8 + $0xb0] sm:$0xf]
          %v1475 = vld [vmem:[#allocation8 + $0xb4] sm:$0xf]
          %v1476 = vld [vmem:[#allocation8 + $0xb8] sm:$0xf]
          %v1477 = vld [vmem:[#allocation8 + $0xbc] sm:$0xf]
          %v1478 = vld [vmem:[#allocation8 + $0xc0] sm:$0xf]
          %v1479 = vld [vmem:[#allocation8 + $0xc4] sm:$0xf]
          %v1480 = vld [vmem:[#allocation8 + $0xc8] sm:$0xf]
          %v1481 = vld [vmem:[#allocation8 + $0xcc] sm:$0xf]
          %v1482 = vld [vmem:[#allocation8 + $0xd0] sm:$0xf]
          %v1483 = vld [vmem:[#allocation8 + $0xd4] sm:$0xf]
          %v1484 = vld [vmem:[#allocation8 + $0xd8] sm:$0xf]
          %v1485 = vld [vmem:[#allocation8 + $0xdc] sm:$0xf]
          %v1486 = vld [vmem:[#allocation8 + $0xe0] sm:$0xf]
          %v1487 = vld [vmem:[#allocation8 + $0xe4] sm:$0xf]
          %v1488 = vld [vmem:[#allocation8 + $0xe8] sm:$0xf]
          %v1489 = vld [vmem:[#allocation8 + $0xec] sm:$0xf]
          %v1490 = vld [vmem:[#allocation8 + $0xf0] sm:$0xf]
          %v1491 = vld [vmem:[#allocation8 + $0xf4] sm:$0xf]
          %v1492 = vld [vmem:[#allocation8 + $0xf8] sm:$0xf]
          %v1493 = vld [vmem:[#allocation8 + $0xfc] sm:$0xf]
          %v1494 = vld [vmem:[%s5] sm:$0x1]
          %v1496 = vlaneseq
          %v1497 = vshrl.u32 %v1496, 7
          %v1498 = vsub.s32 0, %v1497
          %v1499 = vrot.slane %v1494, %v1498
          %v1565 = vunpack.c.l.b16 %v1430
          %v1566 = vunpack.c.l.b16 %v1431
          %v1567 = vunpack.c.l.b16 %v1432
          %v1568 = vunpack.c.l.b16 %v1433
          %v1569 = vunpack.c.l.b16 %v1434
          %v1570 = vunpack.c.l.b16 %v1435
          %v1571 = vunpack.c.l.b16 %v1436
          %v1572 = vunpack.c.l.b16 %v1437
          %v1573 = vunpack.c.l.b16 %v1438
          %v1574 = vunpack.c.l.b16 %v1439
          %v1575 = vunpack.c.l.b16 %v1440
          %v1576 = vunpack.c.l.b16 %v1441
          %v1577 = vunpack.c.l.b16 %v1442
          %v1578 = vunpack.c.l.b16 %v1443
          %v1579 = vunpack.c.l.b16 %v1444
          %v1580 = vunpack.c.l.b16 %v1445
          %v1581 = vunpack.c.l.b16 %v1446
          %v1582 = vunpack.c.l.b16 %v1447
          %v1583 = vunpack.c.l.b16 %v1448
          %v1584 = vunpack.c.l.b16 %v1449
          %v1585 = vunpack.c.l.b16 %v1450
          %v1586 = vunpack.c.l.b16 %v1451
          %v1587 = vunpack.c.l.b16 %v1452
          %v1588 = vunpack.c.l.b16 %v1453
          %v1589 = vunpack.c.l.b16 %v1454
          %v1590 = vunpack.c.l.b16 %v1455
          %v1591 = vunpack.c.l.b16 %v1456
          %v1592 = vunpack.c.l.b16 %v1457
          %v1593 = vunpack.c.l.b16 %v1458
          %v1594 = vunpack.c.l.b16 %v1459
          %v1595 = vunpack.c.l.b16 %v1460
          %v1596 = vunpack.c.l.b16 %v1461
          %v1597 = vunpack.c.l.b16 %v1462
          %v1598 = vunpack.c.l.b16 %v1463
          %v1599 = vunpack.c.l.b16 %v1464
          %v1600 = vunpack.c.l.b16 %v1465
          %v1601 = vunpack.c.l.b16 %v1466
          %v1602 = vunpack.c.l.b16 %v1467
          %v1603 = vunpack.c.l.b16 %v1468
          %v1604 = vunpack.c.l.b16 %v1469
          %v1605 = vunpack.c.l.b16 %v1470
          %v1606 = vunpack.c.l.b16 %v1471
          %v1607 = vunpack.c.l.b16 %v1472
          %v1608 = vunpack.c.l.b16 %v1473
          %v1609 = vunpack.c.l.b16 %v1474
          %v1610 = vunpack.c.l.b16 %v1475
          %v1611 = vunpack.c.l.b16 %v1476
          %v1612 = vunpack.c.l.b16 %v1477
          %v1613 = vunpack.c.l.b16 %v1478
          %v1614 = vunpack.c.l.b16 %v1479
          %v1615 = vunpack.c.l.b16 %v1480
          %v1616 = vunpack.c.l.b16 %v1481
          %v1617 = vunpack.c.l.b16 %v1482
          %v1618 = vunpack.c.l.b16 %v1483
          %v1619 = vunpack.c.l.b16 %v1484
          %v1620 = vunpack.c.l.b16 %v1485
          %v1621 = vunpack.c.l.b16 %v1486
          %v1622 = vunpack.c.l.b16 %v1487
          %v1623 = vunpack.c.l.b16 %v1488
          %v1624 = vunpack.c.l.b16 %v1489
          %v1625 = vunpack.c.l.b16 %v1490
          %v1626 = vunpack.c.l.b16 %v1491
          %v1627 = vunpack.c.l.b16 %v1492
          %v1628 = vunpack.c.l.b16 %v1493
          %v1629 = vpack.c.b16 %v1566, %v1565
          %v1630 = vpack.c.b16 %v1568, %v1567
          %v1631 = vpack.c.b16 %v1570, %v1569
          %v1632 = vpack.c.b16 %v1572, %v1571
          %v1633 = vpack.c.b16 %v1574, %v1573
          %v1634 = vpack.c.b16 %v1576, %v1575
          %v1635 = vpack.c.b16 %v1578, %v1577
          %v1636 = vpack.c.b16 %v1580, %v1579
          %v1637 = vpack.c.b16 %v1582, %v1581
          %v1638 = vpack.c.b16 %v1584, %v1583
          %v1639 = vpack.c.b16 %v1586, %v1585
          %v1640 = vpack.c.b16 %v1588, %v1587
          %v1641 = vpack.c.b16 %v1590, %v1589
          %v1642 = vpack.c.b16 %v1592, %v1591
          %v1643 = vpack.c.b16 %v1594, %v1593
          %v1644 = vpack.c.b16 %v1596, %v1595
          %v1645 = vpack.c.b16 %v1598, %v1597
          %v1646 = vpack.c.b16 %v1600, %v1599
          %v1647 = vpack.c.b16 %v1602, %v1601
          %v1648 = vpack.c.b16 %v1604, %v1603
          %v1649 = vpack.c.b16 %v1606, %v1605
          %v1650 = vpack.c.b16 %v1608, %v1607
          %v1651 = vpack.c.b16 %v1610, %v1609
          %v1652 = vpack.c.b16 %v1612, %v1611
          %v1653 = vpack.c.b16 %v1614, %v1613
          %v1654 = vpack.c.b16 %v1616, %v1615
          %v1655 = vpack.c.b16 %v1618, %v1617
          %v1656 = vpack.c.b16 %v1620, %v1619
          %v1657 = vpack.c.b16 %v1622, %v1621
          %v1658 = vpack.c.b16 %v1624, %v1623
          %v1659 = vpack.c.b16 %v1626, %v1625
          %v1660 = vpack.c.b16 %v1628, %v1627
          %1693 = vmatprep.subr.bf16.mxu0 0
          %1694 = vmatpush1.bf16.msra.mxu0 %v1629
          %1695 = vmatprep.subr.bf16.mxu0 0
          %1696 = vmatpush1.bf16.msra.mxu0 %v1630
          %1697 = vmatprep.subr.bf16.mxu0 0
          %1698 = vmatpush1.bf16.msra.mxu0 %v1631
          %1699 = vmatprep.subr.bf16.mxu0 0
          %1700 = vmatpush1.bf16.msra.mxu0 %v1632
          %1701 = vmatprep.subr.bf16.mxu0 0
          %1702 = vmatpush1.bf16.msra.mxu0 %v1633
          %1703 = vmatprep.subr.bf16.mxu0 0
          %1704 = vmatpush1.bf16.msra.mxu0 %v1634
          %1705 = vmatprep.subr.bf16.mxu0 0
          %1706 = vmatpush1.bf16.msra.mxu0 %v1635
          %1707 = vmatprep.subr.bf16.mxu0 0
          %1708 = vmatpush1.bf16.msra.mxu0 %v1636
          %1709 = vmatprep.subr.bf16.mxu0 0
          %1710 = vmatpush1.bf16.msra.mxu0 %v1637
          %1711 = vmatprep.subr.bf16.mxu0 0
          %1712 = vmatpush1.bf16.msra.mxu0 %v1638
          %1713 = vmatprep.subr.bf16.mxu0 0
          %1714 = vmatpush1.bf16.msra.mxu0 %v1639
          %1715 = vmatprep.subr.bf16.mxu0 0
          %1716 = vmatpush1.bf16.msra.mxu0 %v1640
          %1717 = vmatprep.subr.bf16.mxu0 0
          %1718 = vmatpush1.bf16.msra.mxu0 %v1641
          %1719 = vmatprep.subr.bf16.mxu0 0
          %1720 = vmatpush1.bf16.msra.mxu0 %v1642
          %1721 = vmatprep.subr.bf16.mxu0 0
          %1722 = vmatpush1.bf16.msra.mxu0 %v1643
          %1723 = vmatprep.subr.bf16.mxu0 0
          %1724 = vmatpush1.bf16.msra.mxu0 %v1644
          %1725 = vmatprep.mubr.bf16.mxu0 %v1427
          %1726 = vmatmul.mubr.bf16.gmra.mrb[0].mxu0 %v1426
          %v1727 = vpop.f32.mrb[0].mxu0
          %v1728 = vadd.f32 %v1499, %v1727
          %v1729 = vpop.f32.mrb[0].mxu0
          %v1730 = vpop.f32.mrb[0].mxu0
          %v1731 = vpop.f32.mrb[0].mxu0
          %1732 = vdwg.mxu0
          %1733 = vmatprep.subr.bf16.mxu0 0
          %1734 = vmatpush1.bf16.msra.mxu0 %v1645
          %1735 = vmatprep.subr.bf16.mxu0 0
          %1736 = vmatpush1.bf16.msra.mxu0 %v1646
          %1737 = vmatprep.subr.bf16.mxu0 0
          %1738 = vmatpush1.bf16.msra.mxu0 %v1647
          %1739 = vmatprep.subr.bf16.mxu0 0
          %1740 = vmatpush1.bf16.msra.mxu0 %v1648
          %1741 = vmatprep.subr.bf16.mxu0 0
          %1742 = vmatpush1.bf16.msra.mxu0 %v1649
          %1743 = vmatprep.subr.bf16.mxu0 0
          %1744 = vmatpush1.bf16.msra.mxu0 %v1650
          %1745 = vmatprep.subr.bf16.mxu0 0
          %1746 = vmatpush1.bf16.msra.mxu0 %v1651
          %1747 = vmatprep.subr.bf16.mxu0 0
          %1748 = vmatpush1.bf16.msra.mxu0 %v1652
          %1749 = vmatprep.subr.bf16.mxu0 0
          %1750 = vmatpush1.bf16.msra.mxu0 %v1653
          %1751 = vmatprep.subr.bf16.mxu0 0
          %1752 = vmatpush1.bf16.msra.mxu0 %v1654
          %1753 = vmatprep.subr.bf16.mxu0 0
          %1754 = vmatpush1.bf16.msra.mxu0 %v1655
          %1755 = vmatprep.subr.bf16.mxu0 0
          %1756 = vmatpush1.bf16.msra.mxu0 %v1656
          %1757 = vmatprep.subr.bf16.mxu0 0
          %1758 = vmatpush1.bf16.msra.mxu0 %v1657
          %1759 = vmatprep.subr.bf16.mxu0 0
          %1760 = vmatpush1.bf16.msra.mxu0 %v1658
          %1761 = vmatprep.subr.bf16.mxu0 0
          %1762 = vmatpush1.bf16.msra.mxu0 %v1659
          %1763 = vmatprep.subr.bf16.mxu0 0
          %1764 = vmatpush1.bf16.msra.mxu0 %v1660
          %1765 = vmatprep.mubr.bf16.mxu0 %v1429
          %1766 = vmatmul.mubr.bf16.gmra.mrb[0].mxu0 %v1428
          %v1767 = vpop.f32.mrb[0].mxu0
          %v1768 = vadd.f32 %v1728, %v1767
          %v1769 = vpop.f32.mrb[0].mxu0
          %v1770 = vpop.f32.mrb[0].mxu0
          %v1771 = vpop.f32.mrb[0].mxu0
          %1772 = vdwg.mxu0
          %1773 = vst [vmem:[#allocation9] sm:$0xff] %v1768
        $region64: #{tpu_custom_call.1} parent=43 // pred_fallthru
          _
        // Predicated region
        $region65: #{tpu_custom_call.1} parent=43 // pred_check
          %p1774 = pneg %p173
        $region66: #{tpu_custom_call.1} parent=43 // pred_check_branch
          %1776 = sbr.rel (%p1774) target = $region68
        $region67: #{tpu_custom_call.1} parent=43 // pred_region
          %s1778 = ssub.s32 128, 128
          %1779 = vsyncadd [#allocation5], %s1778
          %s1781 = sshll.u32 [#allocation9], 4
          %s1782 = int_to_ptr.vmem [resolvable:$true] %s1781
          %1784 = dma.vmem_to_hbm [thread:$0]  %s1782, 128, %s6, [#allocation5]
        $region68: #{tpu_custom_call.1} parent=43 // pred_fallthru
          _
        // Predicated region
        $region69: #{tpu_custom_call.1} parent=43 // pred_check
          %p1785 = pneg %p173
        $region70: #{tpu_custom_call.1} parent=43 // pred_check_branch
          %1787 = sbr.rel (%p1785) target = $region72
        $region71: #{tpu_custom_call.1} parent=43 // pred_region
          %1788 = dma.done [#allocation5], 128
        $region72: #{tpu_custom_call.1} parent=43 // pred_fallthru
          _
      $region44: #{tpu_custom_call.1} parent=5 // pred_fallthru
        _
      %p1789 = scmp.le.s32.totalorder 2, %s19
      // Predicated region
      $region73: #{tpu_custom_call.1} parent=5 // pred_check
        %p1790 = pneg %p1789
      $region74: #{tpu_custom_call.1} parent=5 // pred_check_branch
        %1792 = sbr.rel (%p1790) target = $region76
      $region75: #{tpu_custom_call.1} parent=5 // pred_region
        %s1793 = ssub.s32 %s19, 2
      $region76: #{tpu_custom_call.1} parent=5 // pred_fallthru
        _
    $region6: #{tpu_custom_call.1} parent=1 // loop_footer
      %s23 = sadd.s32 1, %s19
    $region7: #{tpu_custom_call.1} parent=1 // loop_footer_branch
      %18 = sbr.rel target = $region3
    $region8: #{tpu_custom_call.1} parent=1 // loop_exit
      _
    %1794 = vsyncpa [#allocation4], 1
    %s1795 = scalar_lea.sflag [#allocation4], 1
    %1796 = vsyncpa %s1795, 1
    %1797 = vsyncpa [#allocation7], 1
    %s1798 = scalar_lea.sflag [#allocation7], 1
    %1799 = vsyncpa %s1798, 1
    %1800 = vsyncpa [#allocation5], 1
    %s1801 = scalar_lea.sflag [#allocation5], 1
    %1802 = vsyncpa %s1801, 1

</llo_original>
